<compile_context>
chip_gen: v7x
topology: tpu7x:2x2x1
jax: 0.10.0
libtpu: 0.0.40
codegen_flags: <defaults>
</compile_context>

<pallas_src>
import jax
import jax.numpy as jnp
from jax.experimental import pallas as pl
from jax.experimental.pallas import tpu as pltpu


def _round_up(x, m):
    return (x + m - 1) // m * m


# ---------------------------------------------------------------------------
# Pallas kernel: whole ConvolutionalBlock forward for one batch tile.
# ---------------------------------------------------------------------------
def conv_block_kernel(xs_ref, w_ref, b_ref, o_ref):
    """Fused forward for one batch tile.

    xs_ref: (Nb, Ho1, W, Cp)  layer-1 im2col'd input, contraction dim zero-padded
    w_ref : (9, Cp, Cp)       [w1_im2col, w2 taps 0..3, w3 taps 0..3], zero-padded
    b_ref : (3, Cp)           f32 biases, zero-padded
    o_ref : (Nb, W, Cp)       mean-over-H of conv3 output (lane-dense slab)
    """
    Nb, Ho1, Wd, Cp = xs_ref.shape
    mm_dtype = w_ref.dtype                 # bf16 weights => bf16 MXU operands

    def maxpool_h2(x):
        # MaxPool2d((2,1), stride (2,1)) over H: VPU pair-max of whole tiles.
        n, h, w, c = x.shape
        ho = h // 2
        return jnp.max(x[:, :2 * ho].reshape(n * ho, 2, w, c),
                       axis=1).reshape(n, ho, w, c)

    def conv_h4(x, w_base, b_row):
        # (4,1) VALID conv as 4 accumulating MXU matmuls (no lane-axis concat;
        # H-slices select whole (8,128) tiles, so no relayout copies).
        n, h, w, c = x.shape
        ho = h - 3

        def tap(kh):
            xs = x[:, kh:kh + ho].reshape(n * ho * w, c).astype(mm_dtype)
            return jnp.dot(xs, w_ref[w_base + kh],
                           preferred_element_type=jnp.float32)

        acc = tap(0)
        for kh in range(1, 4):
            acc = acc + tap(kh)
        return (acc + b_row).reshape(n, ho, w, Cp)

    # Layer 1: one MXU matmul on the pre-im2col'd, K-padded input.
    xs = xs_ref[...].reshape(Nb * Ho1 * Wd, Cp).astype(mm_dtype)
    h = jnp.dot(xs, w_ref[0], preferred_element_type=jnp.float32) + b_ref[0:1, :]
    h = jnp.maximum(h, 0.0).reshape(Nb, Ho1, Wd, Cp)
    h = maxpool_h2(h)

    # Layer 2 (+ ReLU + pool) and layer 3.
    h = maxpool_h2(jnp.maximum(conv_h4(h, 1, b_ref[1:2, :]), 0.0))
    h = conv_h4(h, 5, b_ref[2:3, :])                      # (Nb, Ho3, W, Cp)

    # AdaptiveAvgPool2d((1, W)) with input width == W: identity over W, mean over H.
    o_ref[...] = jnp.mean(h, axis=1)


# ---------------------------------------------------------------------------
# Parameter packing: PyTorch-layout weights -> lane-dense padded packs.
# ---------------------------------------------------------------------------
def _pack_params(torch_params, cp, mm_dtype):
    (w1, b1), (w2, b2), (w3, b3) = torch_params          # wK: (Co, Ci, 4, 1)

    def taps(w):                                          # -> (4, Ci, Co)
        return jnp.transpose(w[:, :, :, 0], (2, 1, 0))

    blocks = []
    # Layer 1: im2col'd single-matmul weight, rows ordered (kh, ci).
    t1 = taps(w1)
    k1, co1 = t1.shape[0] * t1.shape[1], t1.shape[2]
    w1_mat = t1.reshape(k1, co1)
    blocks.append(jnp.zeros((cp, cp), jnp.float32).at[:k1, :co1].set(w1_mat))
    # Layers 2/3: one (Cp, Cp) block per height tap.
    for w in (w2, w3):
        t = taps(w)
        for kh in range(4):
            blk = jnp.zeros((cp, cp), jnp.float32)
            blocks.append(blk.at[:t.shape[1], :t.shape[2]].set(t[kh]))
    w_pack = jnp.stack(blocks, axis=0).astype(mm_dtype)   # (9, cp, cp)

    b_pack = jnp.stack(
        [jnp.zeros((cp,), jnp.float32).at[:b.shape[0]].set(b)
         for b in (b1, b2, b3)], axis=0)                   # (3, cp), f32
    return w_pack, b_pack


# ---------------------------------------------------------------------------
# Wrapper: PyTorch-style NCHW in, NCHW out.
# ---------------------------------------------------------------------------
def conv_block_forward(x_nchw, torch_params, *, use_bf16_matmul=False,
                       batch_tile=1, n_windows=None):
    """x_nchw: (N, C_in, H, W) f32.  Returns (N, C3, 1, W) like the PyTorch module."""
    (w1, _), (w2, _), (w3, _) = torch_params
    N, C_in, H, W = x_nchw.shape
    co1, co2, co3 = w1.shape[0], w2.shape[0], w3.shape[0]
    assert w1.shape[1] == C_in and w2.shape[1] == co1 and w3.shape[1] == co2

    # TODO(synk): general AdaptiveAvgPool2d((1, n_windows)); here the pool is
    # identity over W (mean over H only), which requires input width == N_WINDOWS.
    n_windows = W if n_windows is None else n_windows
    assert n_windows == W, "kernel implements adaptive pool only for W == N_WINDOWS"

    # Stage heights: conv (4,1) VALID, pool (2,1) stride (2,1).
    ho1 = H - 3
    hp1 = ho1 // 2
    ho2 = hp1 - 3
    hp2 = ho2 // 2
    ho3 = hp2 - 3
    assert H >= 4 and hp1 >= 4 and hp2 >= 4 and ho3 >= 1, f"H={H} is too small"

    Nb = N if batch_tile is None else batch_tile
    assert N % Nb == 0, "batch_tile must divide N"

    # Uniform padded channel/contraction width -> lane-dense vregs + stores.
    cp = max(_round_up(4 * C_in, 128), _round_up(max(co1, co2, co3), 128))
    # TODO(synk): per-layer padded widths for large production channel counts.

    mm_dtype = jnp.bfloat16 if use_bf16_matmul else jnp.float32
    w_pack, b_pack = _pack_params(torch_params, cp, mm_dtype)

    # Wrapper-side layer-1 im2col: NCHW -> NHWC -> stack the 4 H-taps on the
    # trailing (lane) axis -> zero-pad the contraction dim to cp.
    x_nhwc = jnp.transpose(x_nchw, (0, 2, 3, 1))                  # (N, H, W, Ci)
    xs = jnp.concatenate([x_nhwc[:, kh:kh + ho1] for kh in range(4)], axis=-1)
    xs = jnp.pad(xs, ((0, 0), (0, 0), (0, 0), (0, cp - 4 * C_in)))
    xs = xs.astype(mm_dtype)                                      # (N, ho1, W, cp)

    flops = 2 * cp * cp * (N * ho1 * W + 4 * N * ho2 * W + 4 * N * ho3 * W)
    bytes_accessed = (xs.size * xs.dtype.itemsize
                      + w_pack.size * w_pack.dtype.itemsize
                      + b_pack.size * 4
                      + N * W * cp * 4)
    cost = pl.CostEstimate(flops=flops, transcendentals=0,
                           bytes_accessed=bytes_accessed)

    out = pl.pallas_call(
        conv_block_kernel,
        out_shape=jax.ShapeDtypeStruct((N, W, cp), jnp.float32),
        grid=(N // Nb,),
        in_specs=[
            pl.BlockSpec((Nb, ho1, W, cp), lambda i: (i, 0, 0, 0)),
            pl.BlockSpec(w_pack.shape, lambda i: (0, 0, 0)),
            pl.BlockSpec(b_pack.shape, lambda i: (0, 0)),
        ],
        out_specs=pl.BlockSpec((Nb, W, cp), lambda i: (i, 0, 0)),
        compiler_params=pltpu.CompilerParams(
            dimension_semantics=("parallel",),
            vmem_limit_bytes=32 * 1024 * 1024),
        cost_estimate=cost,
    )(xs, w_pack, b_pack)

    # Lane-dense (N, W, cp) slab -> slice off channel padding -> NCHW (N, C3, 1, W).
    return jnp.transpose(out[:, :, :co3], (0, 2, 1))[:, :, None, :]


# ---------------------------------------------------------------------------
# Pure-JAX reference (PyTorch semantics) for the correctness check.
# ---------------------------------------------------------------------------
def ref_forward(x_nchw, torch_params):
    (w1, b1), (w2, b2), (w3, b3) = torch_params           # wK: (Co, Ci, 4, 1)

    def conv(x, w, b):
        y = jax.lax.conv_general_dilated(
            x, w, window_strides=(1, 1), padding="VALID",
            dimension_numbers=("NCHW", "OIHW", "NCHW"))
        return y + b[None, :, None, None]

    def maxpool(x):
        return jax.lax.reduce_window(
            x, -jnp.inf, jax.lax.max,
            window_dimensions=(1, 1, 2, 1), window_strides=(1, 1, 2, 1),
            padding="VALID")

    h = jnp.maximum(conv(x_nchw, w1, b1), 0.0)
    h = maxpool(h)
    h = jnp.maximum(conv(h, w2, b2), 0.0)
    h = maxpool(h)
    h = conv(h, w3, b3)
    return jnp.mean(h, axis=2, keepdims=True)              # (N, C3, 1, W)


# ---------------------------------------------------------------------------
def make_params(key, in_channels, max_conv_filters):
    chans = [(in_channels, max_conv_filters),
             (max_conv_filters, max_conv_filters // 2),
             (max_conv_filters // 2, max_conv_filters // 4)]
    params = []
    for ci, co in chans:
        key, kw, kb = jax.random.split(key, 3)
        scale = 1.0 / jnp.sqrt(ci * 4.0)
        w = jax.random.uniform(kw, (co, ci, 4, 1), jnp.float32, -scale, scale)
        b = jax.random.uniform(kb, (co,), jnp.float32, -scale, scale)
        params.append((w, b))
    return params


if __name__ == "__main__":
    # Small shapes consistent with the module: batch=2, in_channels=4,
    # H=32 (three (4,1) convs + two (2,1) pools fit), W = N_WINDOWS = 8,
    # max_conv_filters = 32.
    N, C_IN, H, W = 2, 4, 32, 8
    MAX_FILTERS = 32

    key = jax.random.PRNGKey(0)
    key, kx = jax.random.split(key)
    x = jax.random.normal(kx, (N, C_IN, H, W), jnp.float32)
    torch_params = make_params(key, C_IN, MAX_FILTERS)

    ref = jax.block_until_ready(ref_forward(x, torch_params))

    # f32 MXU-operand path (exact check).  batch_tile=1 -> grid=(2,), so the
    # "parallel" batch axis can use both TensorCores on v7x and the input DMA
    # pipelines with compute.
    out = jax.block_until_ready(conv_block_forward(x, torch_params))
    assert out.shape == ref.shape == (N, MAX_FILTERS // 4, 1, W)
    assert jnp.allclose(out, ref, rtol=1e-4, atol=1e-4)

    # bf16 MXU-operand path (weights pre-cast in the wrapper; activations are
    # quantized to bf16 at every layer -> relaxed tolerance).  Useful on all of
    # v5e/v6e/v7x since the MXU is bf16-native; elementwise math stays f32.
    out_bf16 = jax.block_until_ready(
        conv_block_forward(x, torch_params, use_bf16_matmul=True))
    assert jnp.allclose(out_bf16, ref, rtol=5e-2, atol=5e-2)

    print("KERNEL_OK")
</pallas_src>

<mosaic_0001>
module attributes {stable_mosaic.version = 11 : i64} {
  func.func @conv_block_kernel(%arg0: i32, %arg1: memref<1x29x8x128xf32, #tpu.memory_space<vmem>>, %arg2: memref<9x128x128xf32, #tpu.memory_space<vmem>>, %arg3: memref<3x128xf32, #tpu.memory_space<vmem>>, %arg4: memref<1x8x128xf32, #tpu.memory_space<vmem>>) attributes {dimension_semantics = [#tpu.dimension_semantics<parallel>], iteration_bounds = array<i64: 2>, scalar_prefetch = 0 : i64, scratch_operands = 0 : i64, tpu.core_type = #tpu.core_type<tc>, window_params = [{transform_indices = @transform_0, window_bounds = array<i64: 1, 29, 8, 128>}, {pipeline_mode = #tpu.pipeline_mode<synchronous>, transform_indices = @transform_1, window_bounds = array<i64: 9, 128, 128>}, {pipeline_mode = #tpu.pipeline_mode<synchronous>, transform_indices = @transform_2, window_bounds = array<i64: 3, 128>}, {transform_indices = @transform_3, window_bounds = array<i64: 1, 8, 128>}]} {
    %c0 = arith.constant 0 : index
    %c0_0 = arith.constant 0 : index
    %c0_1 = arith.constant 0 : index
    %c0_2 = arith.constant 0 : index
    %0 = vector.load %arg1[%c0, %c0_0, %c0_1, %c0_2] : memref<1x29x8x128xf32, #tpu.memory_space<vmem>>, vector<1x29x8x128xf32>
    %1 = vector.shape_cast %0 : vector<1x29x8x128xf32> to vector<232x128xf32>
    %c0_3 = arith.constant 0 : index
    %c0_4 = arith.constant 0 : index
    %c0_5 = arith.constant 0 : index
    %2 = vector.load %arg2[%c0_3, %c0_4, %c0_5] : memref<9x128x128xf32, #tpu.memory_space<vmem>>, vector<1x128x128xf32>
    %3 = vector.shape_cast %2 : vector<1x128x128xf32> to vector<128x128xf32>
    %cst = arith.constant dense<0.000000e+00> : vector<232x128xf32>
    %4 = tpu.matmul %1, %3, %cst {dimension_numbers = #tpu.dot_dimension_numbers<[1], [0], [0], [1], [0, 0, 1, 1], [], []>} : vector<232x128xf32>, vector<128x128xf32>, vector<232x128xf32> -> vector<232x128xf32>
    %c0_6 = arith.constant 0 : index
    %c0_7 = arith.constant 0 : index
    %5 = vector.load %arg3[%c0_6, %c0_7] : memref<3x128xf32, #tpu.memory_space<vmem>>, vector<1x128xf32>
    %6 = vector.broadcast %5 : vector<1x128xf32> to vector<232x128xf32>
    %7 = arith.addf %4, %6 : vector<232x128xf32>
    %cst_8 = arith.constant 0.000000e+00 : f32
    %8 = vector.broadcast %cst_8 : f32 to vector<232x128xf32>
    %9 = arith.maximumf %7, %8 : vector<232x128xf32>
    %10 = vector.shape_cast %9 : vector<232x128xf32> to vector<1x29x8x128xf32>
    %11 = vector.extract_strided_slice %10 {offsets = [0, 0, 0, 0], sizes = [1, 28, 8, 128], strides = [1, 1, 1, 1]} : vector<1x29x8x128xf32> to vector<1x28x8x128xf32>
    %12 = vector.shape_cast %11 : vector<1x28x8x128xf32> to vector<14x2x8x128xf32>
    %cst_9 = arith.constant dense<0xFF800000> : vector<14x8x128xf32>
    %13 = vector.multi_reduction <maximumf>, %12, %cst_9 [1] : vector<14x2x8x128xf32> to vector<14x8x128xf32>
    %14 = vector.shape_cast %13 : vector<14x8x128xf32> to vector<1x14x8x128xf32>
    %c1 = arith.constant 1 : index
    %c0_10 = arith.constant 0 : index
    %15 = vector.load %arg3[%c1, %c0_10] : memref<3x128xf32, #tpu.memory_space<vmem>>, vector<1x128xf32>
    %16 = vector.extract_strided_slice %14 {offsets = [0, 0, 0, 0], sizes = [1, 11, 8, 128], strides = [1, 1, 1, 1]} : vector<1x14x8x128xf32> to vector<1x11x8x128xf32>
    %17 = vector.shape_cast %16 : vector<1x11x8x128xf32> to vector<88x128xf32>
    %c1_11 = arith.constant 1 : index
    %c0_12 = arith.constant 0 : index
    %c0_13 = arith.constant 0 : index
    %18 = vector.load %arg2[%c1_11, %c0_12, %c0_13] : memref<9x128x128xf32, #tpu.memory_space<vmem>>, vector<1x128x128xf32>
    %19 = vector.shape_cast %18 : vector<1x128x128xf32> to vector<128x128xf32>
    %cst_14 = arith.constant dense<0.000000e+00> : vector<88x128xf32>
    %20 = tpu.matmul %17, %19, %cst_14 {dimension_numbers = #tpu.dot_dimension_numbers<[1], [0], [0], [1], [0, 0, 1, 1], [], []>} : vector<88x128xf32>, vector<128x128xf32>, vector<88x128xf32> -> vector<88x128xf32>
    %21 = vector.extract_strided_slice %14 {offsets = [0, 1, 0, 0], sizes = [1, 11, 8, 128], strides = [1, 1, 1, 1]} : vector<1x14x8x128xf32> to vector<1x11x8x128xf32>
    %22 = vector.shape_cast %21 : vector<1x11x8x128xf32> to vector<88x128xf32>
    %c2 = arith.constant 2 : index
    %c0_15 = arith.constant 0 : index
    %c0_16 = arith.constant 0 : index
    %23 = vector.load %arg2[%c2, %c0_15, %c0_16] : memref<9x128x128xf32, #tpu.memory_space<vmem>>, vector<1x128x128xf32>
    %24 = vector.shape_cast %23 : vector<1x128x128xf32> to vector<128x128xf32>
    %cst_17 = arith.constant dense<0.000000e+00> : vector<88x128xf32>
    %25 = tpu.matmul %22, %24, %cst_17 {dimension_numbers = #tpu.dot_dimension_numbers<[1], [0], [0], [1], [0, 0, 1, 1], [], []>} : vector<88x128xf32>, vector<128x128xf32>, vector<88x128xf32> -> vector<88x128xf32>
    %26 = arith.addf %20, %25 : vector<88x128xf32>
    %27 = vector.extract_strided_slice %14 {offsets = [0, 2, 0, 0], sizes = [1, 11, 8, 128], strides = [1, 1, 1, 1]} : vector<1x14x8x128xf32> to vector<1x11x8x128xf32>
    %28 = vector.shape_cast %27 : vector<1x11x8x128xf32> to vector<88x128xf32>
    %c3 = arith.constant 3 : index
    %c0_18 = arith.constant 0 : index
    %c0_19 = arith.constant 0 : index
    %29 = vector.load %arg2[%c3, %c0_18, %c0_19] : memref<9x128x128xf32, #tpu.memory_space<vmem>>, vector<1x128x128xf32>
    %30 = vector.shape_cast %29 : vector<1x128x128xf32> to vector<128x128xf32>
    %cst_20 = arith.constant dense<0.000000e+00> : vector<88x128xf32>
    %31 = tpu.matmul %28, %30, %cst_20 {dimension_numbers = #tpu.dot_dimension_numbers<[1], [0], [0], [1], [0, 0, 1, 1], [], []>} : vector<88x128xf32>, vector<128x128xf32>, vector<88x128xf32> -> vector<88x128xf32>
    %32 = arith.addf %26, %31 : vector<88x128xf32>
    %33 = vector.extract_strided_slice %14 {offsets = [0, 3, 0, 0], sizes = [1, 11, 8, 128], strides = [1, 1, 1, 1]} : vector<1x14x8x128xf32> to vector<1x11x8x128xf32>
    %34 = vector.shape_cast %33 : vector<1x11x8x128xf32> to vector<88x128xf32>
    %c4 = arith.constant 4 : index
    %c0_21 = arith.constant 0 : index
    %c0_22 = arith.constant 0 : index
    %35 = vector.load %arg2[%c4, %c0_21, %c0_22] : memref<9x128x128xf32, #tpu.memory_space<vmem>>, vector<1x128x128xf32>
    %36 = vector.shape_cast %35 : vector<1x128x128xf32> to vector<128x128xf32>
    %cst_23 = arith.constant dense<0.000000e+00> : vector<88x128xf32>
    %37 = tpu.matmul %34, %36, %cst_23 {dimension_numbers = #tpu.dot_dimension_numbers<[1], [0], [0], [1], [0, 0, 1, 1], [], []>} : vector<88x128xf32>, vector<128x128xf32>, vector<88x128xf32> -> vector<88x128xf32>
    %38 = arith.addf %32, %37 : vector<88x128xf32>
    %39 = vector.broadcast %15 : vector<1x128xf32> to vector<88x128xf32>
    %40 = arith.addf %38, %39 : vector<88x128xf32>
    %41 = vector.shape_cast %40 : vector<88x128xf32> to vector<1x11x8x128xf32>
    %cst_24 = arith.constant 0.000000e+00 : f32
    %42 = vector.broadcast %cst_24 : f32 to vector<1x11x8x128xf32>
    %43 = arith.maximumf %41, %42 : vector<1x11x8x128xf32>
    %44 = vector.extract_strided_slice %43 {offsets = [0, 0, 0, 0], sizes = [1, 10, 8, 128], strides = [1, 1, 1, 1]} : vector<1x11x8x128xf32> to vector<1x10x8x128xf32>
    %45 = vector.shape_cast %44 : vector<1x10x8x128xf32> to vector<5x2x8x128xf32>
    %cst_25 = arith.constant dense<0xFF800000> : vector<5x8x128xf32>
    %46 = vector.multi_reduction <maximumf>, %45, %cst_25 [1] : vector<5x2x8x128xf32> to vector<5x8x128xf32>
    %47 = vector.shape_cast %46 : vector<5x8x128xf32> to vector<1x5x8x128xf32>
    %c2_26 = arith.constant 2 : index
    %c0_27 = arith.constant 0 : index
    %48 = vector.load %arg3[%c2_26, %c0_27] : memref<3x128xf32, #tpu.memory_space<vmem>>, vector<1x128xf32>
    %49 = vector.extract_strided_slice %47 {offsets = [0, 0, 0, 0], sizes = [1, 2, 8, 128], strides = [1, 1, 1, 1]} : vector<1x5x8x128xf32> to vector<1x2x8x128xf32>
    %50 = vector.shape_cast %49 : vector<1x2x8x128xf32> to vector<16x128xf32>
    %c5 = arith.constant 5 : index
    %c0_28 = arith.constant 0 : index
    %c0_29 = arith.constant 0 : index
    %51 = vector.load %arg2[%c5, %c0_28, %c0_29] : memref<9x128x128xf32, #tpu.memory_space<vmem>>, vector<1x128x128xf32>
    %52 = vector.shape_cast %51 : vector<1x128x128xf32> to vector<128x128xf32>
    %cst_30 = arith.constant dense<0.000000e+00> : vector<16x128xf32>
    %53 = tpu.matmul %50, %52, %cst_30 {dimension_numbers = #tpu.dot_dimension_numbers<[1], [0], [0], [1], [0, 0, 1, 1], [], []>} : vector<16x128xf32>, vector<128x128xf32>, vector<16x128xf32> -> vector<16x128xf32>
    %54 = vector.extract_strided_slice %47 {offsets = [0, 1, 0, 0], sizes = [1, 2, 8, 128], strides = [1, 1, 1, 1]} : vector<1x5x8x128xf32> to vector<1x2x8x128xf32>
    %55 = vector.shape_cast %54 : vector<1x2x8x128xf32> to vector<16x128xf32>
    %c6 = arith.constant 6 : index
    %c0_31 = arith.constant 0 : index
    %c0_32 = arith.constant 0 : index
    %56 = vector.load %arg2[%c6, %c0_31, %c0_32] : memref<9x128x128xf32, #tpu.memory_space<vmem>>, vector<1x128x128xf32>
    %57 = vector.shape_cast %56 : vector<1x128x128xf32> to vector<128x128xf32>
    %cst_33 = arith.constant dense<0.000000e+00> : vector<16x128xf32>
    %58 = tpu.matmul %55, %57, %cst_33 {dimension_numbers = #tpu.dot_dimension_numbers<[1], [0], [0], [1], [0, 0, 1, 1], [], []>} : vector<16x128xf32>, vector<128x128xf32>, vector<16x128xf32> -> vector<16x128xf32>
    %59 = arith.addf %53, %58 : vector<16x128xf32>
    %60 = vector.extract_strided_slice %47 {offsets = [0, 2, 0, 0], sizes = [1, 2, 8, 128], strides = [1, 1, 1, 1]} : vector<1x5x8x128xf32> to vector<1x2x8x128xf32>
    %61 = vector.shape_cast %60 : vector<1x2x8x128xf32> to vector<16x128xf32>
    %c7 = arith.constant 7 : index
    %c0_34 = arith.constant 0 : index
    %c0_35 = arith.constant 0 : index
    %62 = vector.load %arg2[%c7, %c0_34, %c0_35] : memref<9x128x128xf32, #tpu.memory_space<vmem>>, vector<1x128x128xf32>
    %63 = vector.shape_cast %62 : vector<1x128x128xf32> to vector<128x128xf32>
    %cst_36 = arith.constant dense<0.000000e+00> : vector<16x128xf32>
    %64 = tpu.matmul %61, %63, %cst_36 {dimension_numbers = #tpu.dot_dimension_numbers<[1], [0], [0], [1], [0, 0, 1, 1], [], []>} : vector<16x128xf32>, vector<128x128xf32>, vector<16x128xf32> -> vector<16x128xf32>
    %65 = arith.addf %59, %64 : vector<16x128xf32>
    %66 = vector.extract_strided_slice %47 {offsets = [0, 3, 0, 0], sizes = [1, 2, 8, 128], strides = [1, 1, 1, 1]} : vector<1x5x8x128xf32> to vector<1x2x8x128xf32>
    %67 = vector.shape_cast %66 : vector<1x2x8x128xf32> to vector<16x128xf32>
    %c8 = arith.constant 8 : index
    %c0_37 = arith.constant 0 : index
    %c0_38 = arith.constant 0 : index
    %68 = vector.load %arg2[%c8, %c0_37, %c0_38] : memref<9x128x128xf32, #tpu.memory_space<vmem>>, vector<1x128x128xf32>
    %69 = vector.shape_cast %68 : vector<1x128x128xf32> to vector<128x128xf32>
    %cst_39 = arith.constant dense<0.000000e+00> : vector<16x128xf32>
    %70 = tpu.matmul %67, %69, %cst_39 {dimension_numbers = #tpu.dot_dimension_numbers<[1], [0], [0], [1], [0, 0, 1, 1], [], []>} : vector<16x128xf32>, vector<128x128xf32>, vector<16x128xf32> -> vector<16x128xf32>
    %71 = arith.addf %65, %70 : vector<16x128xf32>
    %72 = vector.broadcast %48 : vector<1x128xf32> to vector<16x128xf32>
    %73 = arith.addf %71, %72 : vector<16x128xf32>
    %74 = vector.shape_cast %73 : vector<16x128xf32> to vector<1x2x8x128xf32>
    %cst_40 = arith.constant dense<0.000000e+00> : vector<1x8x128xf32>
    %75 = vector.multi_reduction <add>, %74, %cst_40 [1] : vector<1x2x8x128xf32> to vector<1x8x128xf32>
    %cst_41 = arith.constant 2.000000e+00 : f32
    %76 = vector.broadcast %cst_41 : f32 to vector<1x8x128xf32>
    %77 = arith.divf %75, %76 : vector<1x8x128xf32>
    %c0_42 = arith.constant 0 : index
    %c0_43 = arith.constant 0 : index
    %c0_44 = arith.constant 0 : index
    %78 = vector.load %arg4[%c0_42, %c0_43, %c0_44] : memref<1x8x128xf32, #tpu.memory_space<vmem>>, vector<1x8x128xf32>
    tpu.vector_store %arg4[%c0_42, %c0_43, %c0_44], %77 {strides = array<i32>} : memref<1x8x128xf32, #tpu.memory_space<vmem>>, vector<1x8x128xf32>,
    return
  }
  func.func @transform_0(%arg0: i32) -> (i32, i32, i32, i32) {
    %c0_i32 = arith.constant 0 : i32
    %c0_i32_0 = arith.constant 0 : i32
    %c0_i32_1 = arith.constant 0 : i32
    %c0_i32_2 = arith.constant 0 : i32
    return %arg0, %c0_i32, %c0_i32_0, %c0_i32_1 : i32, i32, i32, i32
  }
  func.func @transform_1(%arg0: i32) -> (i32, i32, i32) {
    %c0_i32 = arith.constant 0 : i32
    %c0_i32_0 = arith.constant 0 : i32
    %c0_i32_1 = arith.constant 0 : i32
    %c0_i32_2 = arith.constant 0 : i32
    return %c0_i32, %c0_i32_0, %c0_i32_1 : i32, i32, i32
  }
  func.func @transform_2(%arg0: i32) -> (i32, i32) {
    %c0_i32 = arith.constant 0 : i32
    %c0_i32_0 = arith.constant 0 : i32
    %c0_i32_1 = arith.constant 0 : i32
    return %c0_i32, %c0_i32_0 : i32, i32
  }
  func.func @transform_3(%arg0: i32) -> (i32, i32, i32) {
    %c0_i32 = arith.constant 0 : i32
    %c0_i32_0 = arith.constant 0 : i32
    %c0_i32_1 = arith.constant 0 : i32
    return %arg0, %c0_i32, %c0_i32_0 : i32, i32, i32
  }
}

</mosaic_0001>

<llo_original>
// kernel: tpu_custom_call.1
$region0: #{tpu_custom_call.1}
  #allocation0 [shape = 'u32[]', space=smem, size = 0x4, offset = 0x4, fixed_abs, tag = 'smem constant byte address 0x4 - core index']
  #allocation1 [shape = 'u32[144,128]{1,0:T(1,128)}', space=vmem, size = 0x12000, scoped, tag = 'internal scratch']
  %s0 = inlined_call_operand.hbm [shape: f32[2,29,8,128], index: 0, kind: input, shape index: {}]
  %s1 = inlined_call_operand.hbm [shape: f32[9,128,128], index: 1, kind: input, shape index: {}]
  %s2 = inlined_call_operand.vmem [shape: f32[3,128], index: 2, kind: input, shape index: {}]
  %s3 = inlined_call_operand.hbm [shape: f32[2,8,128], index: 3, kind: output, shape index: {}]
  %s4 = sld [smem:[#allocation0]]
  $region53: #{tpu_custom_call.1} parent=0
    _
  %s6 = ssub.s32 1, %s4
  %s7 = scalar_select 0, %s6, %s4
  $region1: #{tpu_custom_call.1} parent=0
    #allocation2 [shape = 'u8[237568]{0}', space=vmem, size = 0x3a000, scoped, tag = 'input window, operand 0']
    #allocation3 [shape = 's32[2]{0}', space=sflag, size = 0x8, scoped, tag = 'scoped memory for tpu_custom_call.1']
    #allocation4 [shape = 's32[2]{0}', space=sflag, size = 0x8, scoped, tag = 'scoped memory for tpu_custom_call.1']
    #allocation5 [shape = 'u8[589824]{0}', space=vmem, size = 0x90000, scoped, tag = 'input window, operand 1, single buffered']
    #allocation6 [shape = 's32[1]{0}', space=sflag, size = 0x4, scoped, tag = 'scoped memory for tpu_custom_call.1']
    #allocation7 [shape = 'u8[8192]{0}', space=vmem, size = 0x2000, scoped, tag = 'output window, operand 0']
    %8 = vsyncpa [#allocation3], 0
    %s9 = scalar_lea.sflag [#allocation3], 1
    %10 = vsyncpa %s9, 0
    %11 = vsyncpa [#allocation6], 0
    %12 = vsyncpa [#allocation4], 0
    %s13 = scalar_lea.sflag [#allocation4], 1
    %14 = vsyncpa %s13, 0
    loop: start=0, step=1, limit=4
    $region2: #{tpu_custom_call.1} parent=1 // loop_pre_header
      _
    $region3: #{tpu_custom_call.1} parent=1 // loop_header
      %s16 = sphi 0, %s20
      %p17 = scmp.ge.s32.totalorder %s16, 4
      %s26 = sphi 0, %s28
      %s29 = sphi 0, %s26
      %s30 = sphi 0, %s29
      %s46 = sphi 0, %s30
      %s50 = sphi 0, %s50
      %s52 = sphi 0, %s50
      %s53 = sphi 0, %s52
      %s67 = sphi 0, %s53
      %s71 = sphi 0, %s71
      %s73 = sphi 0, %s71
      %s74 = sphi 0, %s73
      %s88 = sphi 0, %s74
      %s94 = sphi 0, %s96
      %s97 = sphi 0, %s94
      %s98 = sphi 0, %s97
      %s114 = sphi 0, %s98
    $region4: #{tpu_custom_call.1} parent=1 // loop_header_branch
      %19 = sbr.rel (%p17) target = $region8
    $region5: #{tpu_custom_call.1} parent=1 // loop_body
      %s21 = ssub.s32 %s16, 1
      %s22 = ssub.s32 %s16, 2
      %s23 = sadd.s32 %s16, 1
      %s24 = ssub.s32 %s16, %s23
      %p25 = scmp.eq.s32.totalorder %s24, 0
      %s27 = sadd.s32 %s26, 1
      %s28 = scalar_select %p25, %s26, %s27
      %p31 = pneg %p25
      %p32 = scmp.eq.s32.totalorder %s16, 1
      %p33 = por %p31, %p32
      %p34 = scmp.ne.s32.totalorder %s26, %s29
      %p35 = scmp.eq.s32.totalorder %s16, 0
      %p36 = por %p34, %p35
      %p37 = scmp.ne.s32.totalorder %s26, %s29
      %p38 = scmp.eq.s32.totalorder %s21, 1
      %p39 = por %p37, %p38
      %p40 = scmp.ne.s32.totalorder %s29, %s30
      %p41 = scmp.eq.s32.totalorder %s21, 0
      %p42 = por %p40, %p41
      %p43 = scmp.ne.s32.totalorder %s29, %s30
      %p44 = scmp.eq.s32.totalorder %s22, 1
      %p45 = por %p43, %p44
      %p47 = scmp.ne.s32.totalorder %s30, %s46
      %p48 = scmp.eq.s32.totalorder %s22, 0
      %p49 = por %p47, %p48
      %s51 = sadd.s32 %s50, 1
      %p54 = scmp.eq.s32.totalorder %s16, 1
      %p55 = scmp.ne.s32.totalorder %s50, %s52
      %p56 = scmp.eq.s32.totalorder %s16, 0
      %p57 = por %p55, %p56
      %p58 = scmp.ne.s32.totalorder %s50, %s52
      %p59 = scmp.eq.s32.totalorder %s21, 1
      %p60 = por %p58, %p59
      %p61 = scmp.ne.s32.totalorder %s52, %s53
      %p62 = scmp.eq.s32.totalorder %s21, 0
      %p63 = por %p61, %p62
      %p64 = scmp.ne.s32.totalorder %s52, %s53
      %p65 = scmp.eq.s32.totalorder %s22, 1
      %p66 = por %p64, %p65
      %p68 = scmp.ne.s32.totalorder %s53, %s67
      %p69 = scmp.eq.s32.totalorder %s22, 0
      %p70 = por %p68, %p69
      %s72 = sadd.s32 %s71, 1
      %p75 = scmp.eq.s32.totalorder %s16, 1
      %p76 = scmp.ne.s32.totalorder %s71, %s73
      %p77 = scmp.eq.s32.totalorder %s16, 0
      %p78 = por %p76, %p77
      %p79 = scmp.ne.s32.totalorder %s71, %s73
      %p80 = scmp.eq.s32.totalorder %s21, 1
      %p81 = por %p79, %p80
      %p82 = scmp.ne.s32.totalorder %s73, %s74
      %p83 = scmp.eq.s32.totalorder %s21, 0
      %p84 = por %p82, %p83
      %p85 = scmp.ne.s32.totalorder %s73, %s74
      %p86 = scmp.eq.s32.totalorder %s22, 1
      %p87 = por %p85, %p86
      %p89 = scmp.ne.s32.totalorder %s74, %s88
      %p90 = scmp.eq.s32.totalorder %s22, 0
      %p91 = por %p89, %p90
      %s92 = ssub.s32 %s16, %s23
      %p93 = scmp.eq.s32.totalorder %s92, 0
      %s95 = sadd.s32 %s94, 1
      %s96 = scalar_select %p93, %s94, %s95
      %p99 = pneg %p93
      %p100 = scmp.eq.s32.totalorder %s16, 1
      %p101 = por %p99, %p100
      %p102 = scmp.ne.s32.totalorder %s94, %s97
      %p103 = scmp.eq.s32.totalorder %s16, 0
      %p104 = por %p102, %p103
      %p105 = scmp.ne.s32.totalorder %s94, %s97
      %p106 = scmp.eq.s32.totalorder %s21, 1
      %p107 = por %p105, %p106
      %p108 = scmp.ne.s32.totalorder %s97, %s98
      %p109 = scmp.eq.s32.totalorder %s21, 0
      %p110 = por %p108, %p109
      %p111 = scmp.ne.s32.totalorder %s97, %s98
      %p112 = scmp.eq.s32.totalorder %s22, 1
      %p113 = por %p111, %p112
      %p115 = scmp.ne.s32.totalorder %s98, %s114
      %p116 = scmp.eq.s32.totalorder %s22, 0
      %p117 = por %p115, %p116
      %p118 = scmp.le.s32.totalorder 1, %s16
      %p119 = scmp.lt.s32.totalorder %s16, 3
      %p120 = pnand %p118, %p119
      %p121 = pneg %p120
      // Predicated region
      $region9: #{tpu_custom_call.1} parent=5 // pred_check
        _
      $region10: #{tpu_custom_call.1} parent=5 // pred_check_branch
        %123 = sbr.rel (%p120) target = $region12
      $region11: #{tpu_custom_call.1} parent=5 // pred_region
        %s124 = ssub.s32 %s16, 1
        // Predicated region
        $region13: #{tpu_custom_call.1} parent=11 // pred_check
          %p125 = pneg %p63
        $region14: #{tpu_custom_call.1} parent=11 // pred_check_branch
          %127 = sbr.rel (%p125) target = $region16
        $region15: #{tpu_custom_call.1} parent=11 // pred_region
          %s129 = ssub.s32 18432, 18432
          %130 = vsyncadd [#allocation6], %s129
          %s131 = sshll.u32 [#allocation5], 4
          %s132 = int_to_ptr.vmem [resolvable:$true] %s131
          %137 = dma.hbm_to_vmem [thread:$0]  %s1, 18432, %s132, [#allocation6], 128, 128, 8
        $region16: #{tpu_custom_call.1} parent=11 // pred_fallthru
          _
        // Predicated region
        $region17: #{tpu_custom_call.1} parent=11 // pred_check
          %p138 = pneg %p84
        $region18: #{tpu_custom_call.1} parent=11 // pred_check_branch
          %140 = sbr.rel (%p138) target = $region20
        $region19: #{tpu_custom_call.1} parent=11 // pred_region
          _
        $region20: #{tpu_custom_call.1} parent=11 // pred_fallthru
          _
      $region12: #{tpu_custom_call.1} parent=5 // pred_fallthru
        _
      %p141 = scmp.lt.s32.totalorder %s16, 2
      // Predicated region
      $region21: #{tpu_custom_call.1} parent=5 // pred_check
        %p142 = pneg %p141
      $region22: #{tpu_custom_call.1} parent=5 // pred_check_branch
        %144 = sbr.rel (%p142) target = $region24
      $region23: #{tpu_custom_call.1} parent=5 // pred_region
        // Predicated region
        $region25: #{tpu_custom_call.1} parent=23 // pred_check
          %p145 = pneg %p36
        $region26: #{tpu_custom_call.1} parent=23 // pred_check_branch
          %147 = sbr.rel (%p145) target = $region28
        $region27: #{tpu_custom_call.1} parent=23 // pred_region
          %s148 = sand.u32 %s26, 1
          %s149 = scalar_lea.sflag [#allocation3], %s148
          %s150 = sand.u32 %s26, 1
          %s151 = smul.addr %s150, 232
          %s152 = scalar_lea.vmem [#allocation2], %s151
          %s154 = ssub.s32 3712, 3712
          %155 = vsyncadd %s149, %s154
          %s156 = smul.addr %s16, 29
          %s157 = smul.addr %s156, 128
          %s158 = scalar_lea.hbm %s0, %s157
          %s159 = sshll.u32 %s152, 4
          %s160 = int_to_ptr.vmem [resolvable:$true] %s159
          %165 = dma.hbm_to_vmem [thread:$0]  %s158, 3712, %s160, %s149, 128, 128, 8
        $region28: #{tpu_custom_call.1} parent=23 // pred_fallthru
          _
      $region24: #{tpu_custom_call.1} parent=5 // pred_fallthru
        _
      %p166 = scmp.le.s32.totalorder 1, %s16
      %p167 = scmp.lt.s32.totalorder %s16, 3
      %p168 = pnand %p166, %p167
      %p169 = pneg %p168
      // Predicated region
      $region29: #{tpu_custom_call.1} parent=5 // pred_check
        _
      $region30: #{tpu_custom_call.1} parent=5 // pred_check_branch
        %171 = sbr.rel (%p168) target = $region32
      $region31: #{tpu_custom_call.1} parent=5 // pred_region
        %s172 = ssub.s32 %s16, 1
        %s173 = sand.u32 %s29, 1
        %s174 = scalar_lea.sflag [#allocation3], %s173
        %s175 = sand.u32 %s29, 1
        %s176 = smul.addr %s175, 232
        %s177 = scalar_lea.vmem [#allocation2], %s176
        // Predicated region
        $region33: #{tpu_custom_call.1} parent=31 // pred_check
          %p178 = pneg %p42
        $region34: #{tpu_custom_call.1} parent=31 // pred_check_branch
          %180 = sbr.rel (%p178) target = $region36
        $region35: #{tpu_custom_call.1} parent=31 // pred_region
          %181 = dma.done %s174, 3712
        $region36: #{tpu_custom_call.1} parent=31 // pred_fallthru
          _
        // Predicated region
        $region37: #{tpu_custom_call.1} parent=31 // pred_check
          %p182 = pneg %p63
        $region38: #{tpu_custom_call.1} parent=31 // pred_check_branch
          %184 = sbr.rel (%p182) target = $region40
        $region39: #{tpu_custom_call.1} parent=31 // pred_region
          %185 = dma.done [#allocation6], 18432
        $region40: #{tpu_custom_call.1} parent=31 // pred_fallthru
          _
        %s186 = sand.u32 %s29, 1
        %s187 = scalar_lea.sflag [#allocation3], %s186
        %s188 = sand.u32 %s29, 1
        %s189 = smul.addr %s188, 232
        %s190 = scalar_lea.vmem [#allocation2], %s189
        %p191 = pneg %p42
        %p192 = pneg %p39
        %p193 = pneg %p63
        %p194 = pneg %p60
        %p195 = pneg %p84
        %p196 = pneg %p81
        %p197 = pneg %p110
        %p198 = pneg %p107
        %s199 = sand.u32 %s97, 1
        %s200 = scalar_lea.sflag [#allocation4], %s199
        %s201 = sand.u32 %s97, 1
        %s202 = smul.addr %s201, 8
        %s203 = scalar_lea.vmem [#allocation7], %s202
        %v204 = vld [vmem:[%s177] sm:$0xff]
        %v205 = vld [vmem:[%s177 + $0x8] sm:$0xff]
        %v206 = vld [vmem:[%s177 + $0x10] sm:$0xff]
        %v207 = vld [vmem:[%s177 + $0x18] sm:$0xff]
        %v208 = vld [vmem:[%s177 + $0x20] sm:$0xff]
        %v209 = vld [vmem:[%s177 + $0x28] sm:$0xff]
        %v210 = vld [vmem:[%s177 + $0x30] sm:$0xff]
        %v211 = vld [vmem:[%s177 + $0x38] sm:$0xff]
        %v212 = vld [vmem:[%s177 + $0x40] sm:$0xff]
        %v213 = vld [vmem:[%s177 + $0x48] sm:$0xff]
        %v214 = vld [vmem:[%s177 + $0x50] sm:$0xff]
        %v215 = vld [vmem:[%s177 + $0x58] sm:$0xff]
        %v216 = vld [vmem:[%s177 + $0x60] sm:$0xff]
        %v217 = vld [vmem:[%s177 + $0x68] sm:$0xff]
        %v218 = vld [vmem:[%s177 + $0x70] sm:$0xff]
        %v219 = vld [vmem:[%s177 + $0x78] sm:$0xff]
        %v220 = vld [vmem:[%s177 + $0x80] sm:$0xff]
        %v221 = vld [vmem:[%s177 + $0x88] sm:$0xff]
        %v222 = vld [vmem:[%s177 + $0x90] sm:$0xff]
        %v223 = vld [vmem:[%s177 + $0x98] sm:$0xff]
        %v224 = vld [vmem:[%s177 + $0xa0] sm:$0xff]
        %v225 = vld [vmem:[%s177 + $0xa8] sm:$0xff]
        %v226 = vld [vmem:[%s177 + $0xb0] sm:$0xff]
        %v227 = vld [vmem:[%s177 + $0xb8] sm:$0xff]
        %v228 = vld [vmem:[%s177 + $0xc0] sm:$0xff]
        %v229 = vld [vmem:[%s177 + $0xc8] sm:$0xff]
        %v230 = vld [vmem:[%s177 + $0xd0] sm:$0xff]
        %v231 = vld [vmem:[%s177 + $0xd8] sm:$0xff]
        %v232 = vld [vmem:[%s177 + $0xe0] sm:$0xff]
        %v233 = vld [vmem:[#allocation5] sm:$0xff]
        %v234 = vld [vmem:[#allocation5 + $0x8] sm:$0xff]
        %v235 = vld [vmem:[#allocation5 + $0x10] sm:$0xff]
        %v236 = vld [vmem:[#allocation5 + $0x18] sm:$0xff]
        %v237 = vld [vmem:[#allocation5 + $0x20] sm:$0xff]
        %v238 = vld [vmem:[#allocation5 + $0x28] sm:$0xff]
        %v239 = vld [vmem:[#allocation5 + $0x30] sm:$0xff]
        %v240 = vld [vmem:[#allocation5 + $0x38] sm:$0xff]
        %v241 = vld [vmem:[#allocation5 + $0x40] sm:$0xff]
        %v242 = vld [vmem:[#allocation5 + $0x48] sm:$0xff]
        %v243 = vld [vmem:[#allocation5 + $0x50] sm:$0xff]
        %v244 = vld [vmem:[#allocation5 + $0x58] sm:$0xff]
        %v245 = vld [vmem:[#allocation5 + $0x60] sm:$0xff]
        %v246 = vld [vmem:[#allocation5 + $0x68] sm:$0xff]
        %v247 = vld [vmem:[#allocation5 + $0x70] sm:$0xff]
        %v248 = vld [vmem:[#allocation5 + $0x78] sm:$0xff]
        %v249 = vld [vmem:[%s2] sm:$0x1]
        %v250 = vlaneseq
        %v251 = vshrl.u32 %v250, 7
        %v252 = vsub.s32 0, %v251
        %v253 = vrot.slane %v249, %v252
        %254 = vmatprep.subr.mxu0 0.0
        %255 = vmatpush1.msra.mxu0 %v233
        %256 = vmatprep.subr.mxu0 0.0
        %257 = vmatpush1.msra.mxu0 %v234
        %258 = vmatprep.subr.mxu0 0.0
        %259 = vmatpush1.msra.mxu0 %v235
        %260 = vmatprep.subr.mxu0 0.0
        %261 = vmatpush1.msra.mxu0 %v236
        %262 = vmatprep.subr.mxu0 0.0
        %263 = vmatpush1.msra.mxu0 %v237
        %264 = vmatprep.subr.mxu0 0.0
        %265 = vmatpush1.msra.mxu0 %v238
        %266 = vmatprep.subr.mxu0 0.0
        %267 = vmatpush1.msra.mxu0 %v239
        %268 = vmatprep.subr.mxu0 0.0
        %269 = vmatpush1.msra.mxu0 %v240
        %270 = vmatprep.subr.mxu0 0.0
        %271 = vmatpush1.msra.mxu0 %v241
        %272 = vmatprep.subr.mxu0 0.0
        %273 = vmatpush1.msra.mxu0 %v242
        %274 = vmatprep.subr.mxu0 0.0
        %275 = vmatpush1.msra.mxu0 %v243
        %276 = vmatprep.subr.mxu0 0.0
        %277 = vmatpush1.msra.mxu0 %v244
        %278 = vmatprep.subr.mxu0 0.0
        %279 = vmatpush1.msra.mxu0 %v245
        %280 = vmatprep.subr.mxu0 0.0
        %281 = vmatpush1.msra.mxu0 %v246
        %282 = vmatprep.subr.mxu0 0.0
        %283 = vmatpush1.msra.mxu0 %v247
        %284 = vmatprep.subr.mxu0 0.0
        %285 = vmatpush1.msra.mxu0 %v248
        %286 = vmatprep.subr.mxu0 0.0
        %287 = vmatpush1.msra.mxu0 0.0
        %288 = vmatprep.subr.mxu0 0.0
        %289 = vmatpush1.msra.mxu0 0.0
        %290 = vmatprep.subr.mxu0 0.0
        %291 = vmatpush1.msra.mxu0 0.0
        %292 = vmatprep.subr.mxu0 0.0
        %293 = vmatpush1.msra.mxu0 0.0
        %294 = vmatprep.subr.mxu0 0.0
        %295 = vmatpush1.msra.mxu0 0.0
        %296 = vmatprep.subr.mxu0 0.0
        %297 = vmatpush1.msra.mxu0 0.0
        %298 = vmatprep.subr.mxu0 0.0
        %299 = vmatpush1.msra.mxu0 0.0
        %300 = vmatprep.subr.mxu0 0.0
        %301 = vmatpush1.msra.mxu0 0.0
        %302 = vmatprep.subr.mxu0 0.0
        %303 = vmatpush1.msra.mxu0 0.0
        %304 = vmatprep.subr.mxu0 0.0
        %305 = vmatpush1.msra.mxu0 0.0
        %306 = vmatprep.subr.mxu0 0.0
        %307 = vmatpush1.msra.mxu0 0.0
        %308 = vmatprep.subr.mxu0 0.0
        %309 = vmatpush1.msra.mxu0 0.0
        %310 = vmatprep.subr.mxu0 0.0
        %311 = vmatpush1.msra.mxu0 0.0
        %312 = vmatprep.subr.mxu0 0.0
        %313 = vmatpush1.msra.mxu0 0.0
        %314 = vmatprep.subr.mxu0 0.0
        %315 = vmatpush1.msra.mxu0 0.0
        %316 = vmatprep.subr.mxu0 0.0
        %317 = vmatpush1.msra.mxu0 0.0
        %318 = vmatprep.mubr.f32.mxu0 0.0
        %319 = vmatmul.mubr.f32.gmra.mrb[0].mxu0 %v204
        %v320 = vpop.f32.mrb[0].mxu0
        %v321 = vadd.f32 %v253, %v320
        %v322 = vpop.f32.mrb[0].mxu0
        %323 = vmatprep.mubr.f32.mxu0 0.0
        %324 = vmatmul.mubr.f32.gmra.mrb[0].mxu0 %v205
        %v325 = vpop.f32.mrb[0].mxu0
        %v326 = vadd.f32 %v253, %v325
        %v327 = vpop.f32.mrb[0].mxu0
        %328 = vmatprep.mubr.f32.mxu0 0.0
        %329 = vmatmul.mubr.f32.gmra.mrb[0].mxu0 %v206
        %v330 = vpop.f32.mrb[0].mxu0
        %v331 = vadd.f32 %v253, %v330
        %v332 = vpop.f32.mrb[0].mxu0
        %333 = vmatprep.mubr.f32.mxu0 0.0
        %334 = vmatmul.mubr.f32.gmra.mrb[0].mxu0 %v207
        %v335 = vpop.f32.mrb[0].mxu0
        %v336 = vadd.f32 %v253, %v335
        %v337 = vpop.f32.mrb[0].mxu0
        %338 = vmatprep.mubr.f32.mxu0 0.0
        %339 = vmatmul.mubr.f32.gmra.mrb[0].mxu0 %v208
        %v340 = vpop.f32.mrb[0].mxu0
        %v341 = vadd.f32 %v253, %v340
        %v342 = vpop.f32.mrb[0].mxu0
        %343 = vmatprep.mubr.f32.mxu0 0.0
        %344 = vmatmul.mubr.f32.gmra.mrb[0].mxu0 %v209
        %v345 = vpop.f32.mrb[0].mxu0
        %v346 = vadd.f32 %v253, %v345
        %v347 = vpop.f32.mrb[0].mxu0
        %348 = vmatprep.mubr.f32.mxu0 0.0
        %349 = vmatmul.mubr.f32.gmra.mrb[0].mxu0 %v210
        %v350 = vpop.f32.mrb[0].mxu0
        %v351 = vadd.f32 %v253, %v350
        %v352 = vpop.f32.mrb[0].mxu0
        %353 = vmatprep.mubr.f32.mxu0 0.0
        %354 = vmatmul.mubr.f32.gmra.mrb[0].mxu0 %v211
        %v355 = vpop.f32.mrb[0].mxu0
        %v356 = vadd.f32 %v253, %v355
        %v357 = vpop.f32.mrb[0].mxu0
        %358 = vmatprep.mubr.f32.mxu0 0.0
        %359 = vmatmul.mubr.f32.gmra.mrb[0].mxu0 %v212
        %v360 = vpop.f32.mrb[0].mxu0
        %v361 = vadd.f32 %v253, %v360
        %v362 = vpop.f32.mrb[0].mxu0
        %363 = vmatprep.mubr.f32.mxu0 0.0
        %364 = vmatmul.mubr.f32.gmra.mrb[0].mxu0 %v213
        %v365 = vpop.f32.mrb[0].mxu0
        %v366 = vadd.f32 %v253, %v365
        %v367 = vpop.f32.mrb[0].mxu0
        %368 = vmatprep.mubr.f32.mxu0 0.0
        %369 = vmatmul.mubr.f32.gmra.mrb[0].mxu0 %v214
        %v370 = vpop.f32.mrb[0].mxu0
        %v371 = vadd.f32 %v253, %v370
        %v372 = vpop.f32.mrb[0].mxu0
        %373 = vmatprep.mubr.f32.mxu0 0.0
        %374 = vmatmul.mubr.f32.gmra.mrb[0].mxu0 %v215
        %v375 = vpop.f32.mrb[0].mxu0
        %v376 = vadd.f32 %v253, %v375
        %v377 = vpop.f32.mrb[0].mxu0
        %378 = vmatprep.mubr.f32.mxu0 0.0
        %379 = vmatmul.mubr.f32.gmra.mrb[0].mxu0 %v216
        %v380 = vpop.f32.mrb[0].mxu0
        %v381 = vadd.f32 %v253, %v380
        %v382 = vpop.f32.mrb[0].mxu0
        %383 = vmatprep.mubr.f32.mxu0 0.0
        %384 = vmatmul.mubr.f32.gmra.mrb[0].mxu0 %v217
        %v385 = vpop.f32.mrb[0].mxu0
        %v386 = vadd.f32 %v253, %v385
        %v387 = vpop.f32.mrb[0].mxu0
        %388 = vmatprep.mubr.f32.mxu0 0.0
        %389 = vmatmul.mubr.f32.gmra.mrb[0].mxu0 %v218
        %v390 = vpop.f32.mrb[0].mxu0
        %v391 = vadd.f32 %v253, %v390
        %v392 = vpop.f32.mrb[0].mxu0
        %393 = vmatprep.mubr.f32.mxu0 0.0
        %394 = vmatmul.mubr.f32.gmra.mrb[0].mxu0 %v219
        %v395 = vpop.f32.mrb[0].mxu0
        %v396 = vadd.f32 %v253, %v395
        %v397 = vpop.f32.mrb[0].mxu0
        %398 = vmatprep.mubr.f32.mxu0 0.0
        %399 = vmatmul.mubr.f32.gmra.mrb[0].mxu0 %v220
        %v400 = vpop.f32.mrb[0].mxu0
        %v401 = vadd.f32 %v253, %v400
        %v402 = vpop.f32.mrb[0].mxu0
        %403 = vmatprep.mubr.f32.mxu0 0.0
        %404 = vmatmul.mubr.f32.gmra.mrb[0].mxu0 %v221
        %v405 = vpop.f32.mrb[0].mxu0
        %v406 = vadd.f32 %v253, %v405
        %v407 = vpop.f32.mrb[0].mxu0
        %408 = vmatprep.mubr.f32.mxu0 0.0
        %409 = vmatmul.mubr.f32.gmra.mrb[0].mxu0 %v222
        %v410 = vpop.f32.mrb[0].mxu0
        %v411 = vadd.f32 %v253, %v410
        %v412 = vpop.f32.mrb[0].mxu0
        %413 = vmatprep.mubr.f32.mxu0 0.0
        %414 = vmatmul.mubr.f32.gmra.mrb[0].mxu0 %v223
        %v415 = vpop.f32.mrb[0].mxu0
        %v416 = vadd.f32 %v253, %v415
        %v417 = vpop.f32.mrb[0].mxu0
        %418 = vmatprep.mubr.f32.mxu0 0.0
        %419 = vmatmul.mubr.f32.gmra.mrb[0].mxu0 %v224
        %v420 = vpop.f32.mrb[0].mxu0
        %v421 = vadd.f32 %v253, %v420
        %v422 = vpop.f32.mrb[0].mxu0
        %423 = vmatprep.mubr.f32.mxu0 0.0
        %424 = vmatmul.mubr.f32.gmra.mrb[0].mxu0 %v225
        %v425 = vpop.f32.mrb[0].mxu0
        %v426 = vadd.f32 %v253, %v425
        %v427 = vpop.f32.mrb[0].mxu0
        %428 = vmatprep.mubr.f32.mxu0 0.0
        %429 = vmatmul.mubr.f32.gmra.mrb[0].mxu0 %v226
        %v430 = vpop.f32.mrb[0].mxu0
        %v431 = vadd.f32 %v253, %v430
        %v432 = vpop.f32.mrb[0].mxu0
        %433 = vmatprep.mubr.f32.mxu0 0.0
        %434 = vmatmul.mubr.f32.gmra.mrb[0].mxu0 %v227
        %v435 = vpop.f32.mrb[0].mxu0
        %v436 = vadd.f32 %v253, %v435
        %v437 = vpop.f32.mrb[0].mxu0
        %438 = vmatprep.mubr.f32.mxu0 0.0
        %439 = vmatmul.mubr.f32.gmra.mrb[0].mxu0 %v228
        %v440 = vpop.f32.mrb[0].mxu0
        %v441 = vadd.f32 %v253, %v440
        %v442 = vpop.f32.mrb[0].mxu0
        %443 = vmatprep.mubr.f32.mxu0 0.0
        %444 = vmatmul.mubr.f32.gmra.mrb[0].mxu0 %v229
        %v445 = vpop.f32.mrb[0].mxu0
        %v446 = vadd.f32 %v253, %v445
        %v447 = vpop.f32.mrb[0].mxu0
        %448 = vmatprep.mubr.f32.mxu0 0.0
        %449 = vmatmul.mubr.f32.gmra.mrb[0].mxu0 %v230
        %v450 = vpop.f32.mrb[0].mxu0
        %v451 = vadd.f32 %v253, %v450
        %v452 = vpop.f32.mrb[0].mxu0
        %453 = vmatprep.mubr.f32.mxu0 0.0
        %454 = vmatmul.mubr.f32.gmra.mrb[0].mxu0 %v231
        %v455 = vpop.f32.mrb[0].mxu0
        %v456 = vadd.f32 %v253, %v455
        %v457 = vpop.f32.mrb[0].mxu0
        %458 = vmatprep.mubr.f32.mxu0 0.0
        %459 = vmatmul.mubr.f32.gmra.mrb[0].mxu0 %v232
        %v460 = vpop.f32.mrb[0].mxu0
        %v461 = vpop.f32.mrb[0].mxu0
        %462 = vdwg.mxu0
        %v463 = vmax.f32 %v321, 0.0
        %v464 = vmax.f32 %v326, 0.0
        %v465 = vmax.f32 %v331, 0.0
        %v466 = vmax.f32 %v336, 0.0
        %v467 = vmax.f32 %v341, 0.0
        %v468 = vmax.f32 %v346, 0.0
        %v469 = vmax.f32 %v351, 0.0
        %v470 = vmax.f32 %v356, 0.0
        %v471 = vmax.f32 %v361, 0.0
        %v472 = vmax.f32 %v366, 0.0
        %v473 = vmax.f32 %v371, 0.0
        %v474 = vmax.f32 %v376, 0.0
        %v475 = vmax.f32 %v381, 0.0
        %v476 = vmax.f32 %v386, 0.0
        %v477 = vmax.f32 %v391, 0.0
        %v478 = vmax.f32 %v396, 0.0
        %v479 = vmax.f32 %v401, 0.0
        %v480 = vmax.f32 %v406, 0.0
        %v481 = vmax.f32 %v411, 0.0
        %v482 = vmax.f32 %v416, 0.0
        %v483 = vmax.f32 %v421, 0.0
        %v484 = vmax.f32 %v426, 0.0
        %v485 = vmax.f32 %v431, 0.0
        %v486 = vmax.f32 %v436, 0.0
        %v487 = vmax.f32 %v441, 0.0
        %v488 = vmax.f32 %v446, 0.0
        %v489 = vmax.f32 %v451, 0.0
        %v490 = vmax.f32 %v456, 0.0
        %v491 = vmax.f32 %v463, %v464
        %v492 = vmax.f32 %v465, %v466
        %v493 = vmax.f32 %v467, %v468
        %v494 = vmax.f32 %v469, %v470
        %v495 = vmax.f32 %v471, %v472
        %v496 = vmax.f32 %v473, %v474
        %v497 = vmax.f32 %v475, %v476
        %v498 = vmax.f32 %v477, %v478
        %v499 = vmax.f32 %v479, %v480
        %v500 = vmax.f32 %v481, %v482
        %v501 = vmax.f32 %v483, %v484
        %v502 = vmax.f32 %v485, %v486
        %v503 = vmax.f32 %v487, %v488
        %v504 = vmax.f32 %v489, %v490
        %v505 = vld [vmem:[%s2 + $0x1] sm:$0x1]
        %s506 = scalar_lea.vmem [#allocation5], 128
        %v507 = vld [vmem:[%s506] sm:$0xff]
        %v508 = vld [vmem:[%s506 + $0x8] sm:$0xff]
        %v509 = vld [vmem:[%s506 + $0x10] sm:$0xff]
        %v510 = vld [vmem:[%s506 + $0x18] sm:$0xff]
        %v511 = vld [vmem:[%s506 + $0x20] sm:$0xff]
        %v512 = vld [vmem:[%s506 + $0x28] sm:$0xff]
        %v513 = vld [vmem:[%s506 + $0x30] sm:$0xff]
        %v514 = vld [vmem:[%s506 + $0x38] sm:$0xff]
        %v515 = vld [vmem:[%s506 + $0x40] sm:$0xff]
        %v516 = vld [vmem:[%s506 + $0x48] sm:$0xff]
        %v517 = vld [vmem:[%s506 + $0x50] sm:$0xff]
        %v518 = vld [vmem:[%s506 + $0x58] sm:$0xff]
        %v519 = vld [vmem:[%s506 + $0x60] sm:$0xff]
        %v520 = vld [vmem:[%s506 + $0x68] sm:$0xff]
        %v521 = vld [vmem:[%s506 + $0x70] sm:$0xff]
        %v522 = vld [vmem:[%s506 + $0x78] sm:$0xff]
        %s523 = scalar_lea.vmem [#allocation5], 256
        %v524 = vld [vmem:[%s523] sm:$0xff]
        %v525 = vld [vmem:[%s523 + $0x8] sm:$0xff]
        %v526 = vld [vmem:[%s523 + $0x10] sm:$0xff]
        %v527 = vld [vmem:[%s523 + $0x18] sm:$0xff]
        %v528 = vld [vmem:[%s523 + $0x20] sm:$0xff]
        %v529 = vld [vmem:[%s523 + $0x28] sm:$0xff]
        %v530 = vld [vmem:[%s523 + $0x30] sm:$0xff]
        %v531 = vld [vmem:[%s523 + $0x38] sm:$0xff]
        %v532 = vld [vmem:[%s523 + $0x40] sm:$0xff]
        %v533 = vld [vmem:[%s523 + $0x48] sm:$0xff]
        %v534 = vld [vmem:[%s523 + $0x50] sm:$0xff]
        %v535 = vld [vmem:[%s523 + $0x58] sm:$0xff]
        %v536 = vld [vmem:[%s523 + $0x60] sm:$0xff]
        %v537 = vld [vmem:[%s523 + $0x68] sm:$0xff]
        %v538 = vld [vmem:[%s523 + $0x70] sm:$0xff]
        %v539 = vld [vmem:[%s523 + $0x78] sm:$0xff]
        %540 = vmatprep.subr.mxu0 0.0
        %541 = vmatpush1.msra.mxu0 %v524
        %542 = vmatprep.subr.mxu0 0.0
        %543 = vmatpush1.msra.mxu0 %v525
        %544 = vmatprep.subr.mxu0 0.0
        %545 = vmatpush1.msra.mxu0 %v526
        %546 = vmatprep.subr.mxu0 0.0
        %547 = vmatpush1.msra.mxu0 %v527
        %548 = vmatprep.subr.mxu0 0.0
        %549 = vmatpush1.msra.mxu0 %v528
        %550 = vmatprep.subr.mxu0 0.0
        %551 = vmatpush1.msra.mxu0 %v529
        %552 = vmatprep.subr.mxu0 0.0
        %553 = vmatpush1.msra.mxu0 %v530
        %554 = vmatprep.subr.mxu0 0.0
        %555 = vmatpush1.msra.mxu0 %v531
        %556 = vmatprep.subr.mxu0 0.0
        %557 = vmatpush1.msra.mxu0 %v532
        %558 = vmatprep.subr.mxu0 0.0
        %559 = vmatpush1.msra.mxu0 %v533
        %560 = vmatprep.subr.mxu0 0.0
        %561 = vmatpush1.msra.mxu0 %v534
        %562 = vmatprep.subr.mxu0 0.0
        %563 = vmatpush1.msra.mxu0 %v535
        %564 = vmatprep.subr.mxu0 0.0
        %565 = vmatpush1.msra.mxu0 %v536
        %566 = vmatprep.subr.mxu0 0.0
        %567 = vmatpush1.msra.mxu0 %v537
        %568 = vmatprep.subr.mxu0 0.0
        %569 = vmatpush1.msra.mxu0 %v538
        %570 = vmatprep.subr.mxu0 0.0
        %571 = vmatpush1.msra.mxu0 %v539
        %572 = vmatprep.subr.mxu0 0.0
        %573 = vmatpush1.msra.mxu0 0.0
        %574 = vmatprep.subr.mxu0 0.0
        %575 = vmatpush1.msra.mxu0 0.0
        %576 = vmatprep.subr.mxu0 0.0
        %577 = vmatpush1.msra.mxu0 0.0
        %578 = vmatprep.subr.mxu0 0.0
        %579 = vmatpush1.msra.mxu0 0.0
        %580 = vmatprep.subr.mxu0 0.0
        %581 = vmatpush1.msra.mxu0 0.0
        %582 = vmatprep.subr.mxu0 0.0
        %583 = vmatpush1.msra.mxu0 0.0
        %584 = vmatprep.subr.mxu0 0.0
        %585 = vmatpush1.msra.mxu0 0.0
        %586 = vmatprep.subr.mxu0 0.0
        %587 = vmatpush1.msra.mxu0 0.0
        %588 = vmatprep.subr.mxu0 0.0
        %589 = vmatpush1.msra.mxu0 0.0
        %590 = vmatprep.subr.mxu0 0.0
        %591 = vmatpush1.msra.mxu0 0.0
        %592 = vmatprep.subr.mxu0 0.0
        %593 = vmatpush1.msra.mxu0 0.0
        %594 = vmatprep.subr.mxu0 0.0
        %595 = vmatpush1.msra.mxu0 0.0
        %596 = vmatprep.subr.mxu0 0.0
        %597 = vmatpush1.msra.mxu0 0.0
        %598 = vmatprep.subr.mxu0 0.0
        %599 = vmatpush1.msra.mxu0 0.0
        %600 = vmatprep.subr.mxu0 0.0
        %601 = vmatpush1.msra.mxu0 0.0
        %602 = vmatprep.subr.mxu0 0.0
        %603 = vmatpush1.msra.mxu0 0.0
        %604 = vmatprep.mubr.f32.mxu0 0.0
        %605 = vmatmul.mubr.f32.gmra.mrb[0].mxu0 %v492
        %v606 = vpop.f32.mrb[0].mxu0
        %v607 = vadd.f32 0.0, %v606
        %v608 = vpop.f32.mrb[0].mxu0
        %609 = vmatprep.mubr.f32.mxu0 0.0
        %610 = vmatmul.mubr.f32.gmra.mrb[0].mxu0 %v493
        %v611 = vpop.f32.mrb[0].mxu0
        %v612 = vadd.f32 0.0, %v611
        %v613 = vpop.f32.mrb[0].mxu0
        %614 = vmatprep.mubr.f32.mxu0 0.0
        %615 = vmatmul.mubr.f32.gmra.mrb[0].mxu0 %v494
        %v616 = vpop.f32.mrb[0].mxu0
        %v617 = vadd.f32 0.0, %v616
        %v618 = vpop.f32.mrb[0].mxu0
        %619 = vmatprep.mubr.f32.mxu0 0.0
        %620 = vmatmul.mubr.f32.gmra.mrb[0].mxu0 %v495
        %v621 = vpop.f32.mrb[0].mxu0
        %v622 = vadd.f32 0.0, %v621
        %v623 = vpop.f32.mrb[0].mxu0
        %624 = vmatprep.mubr.f32.mxu0 0.0
        %625 = vmatmul.mubr.f32.gmra.mrb[0].mxu0 %v496
        %v626 = vpop.f32.mrb[0].mxu0
        %v627 = vadd.f32 0.0, %v626
        %v628 = vpop.f32.mrb[0].mxu0
        %629 = vmatprep.mubr.f32.mxu0 0.0
        %630 = vmatmul.mubr.f32.gmra.mrb[0].mxu0 %v497
        %v631 = vpop.f32.mrb[0].mxu0
        %v632 = vadd.f32 0.0, %v631
        %v633 = vpop.f32.mrb[0].mxu0
        %634 = vmatprep.mubr.f32.mxu0 0.0
        %635 = vmatmul.mubr.f32.gmra.mrb[0].mxu0 %v498
        %v636 = vpop.f32.mrb[0].mxu0
        %v637 = vadd.f32 0.0, %v636
        %v638 = vpop.f32.mrb[0].mxu0
        %639 = vmatprep.mubr.f32.mxu0 0.0
        %640 = vmatmul.mubr.f32.gmra.mrb[0].mxu0 %v499
        %v641 = vpop.f32.mrb[0].mxu0
        %v642 = vadd.f32 0.0, %v641
        %v643 = vpop.f32.mrb[0].mxu0
        %644 = vmatprep.mubr.f32.mxu0 0.0
        %645 = vmatmul.mubr.f32.gmra.mrb[0].mxu0 %v500
        %v646 = vpop.f32.mrb[0].mxu0
        %v647 = vadd.f32 0.0, %v646
        %v648 = vpop.f32.mrb[0].mxu0
        %649 = vmatprep.mubr.f32.mxu0 0.0
        %650 = vmatmul.mubr.f32.gmra.mrb[0].mxu0 %v501
        %v651 = vpop.f32.mrb[0].mxu0
        %v652 = vadd.f32 0.0, %v651
        %v653 = vpop.f32.mrb[0].mxu0
        %654 = vmatprep.mubr.f32.mxu0 0.0
        %655 = vmatmul.mubr.f32.gmra.mrb[0].mxu0 %v502
        %v656 = vpop.f32.mrb[0].mxu0
        %v657 = vpop.f32.mrb[0].mxu0
        %658 = vdwg.mxu0
        %659 = vmatprep.subr.mxu0 0.0
        %660 = vmatpush1.msra.mxu0 %v507
        %661 = vmatprep.subr.mxu0 0.0
        %662 = vmatpush1.msra.mxu0 %v508
        %663 = vmatprep.subr.mxu0 0.0
        %664 = vmatpush1.msra.mxu0 %v509
        %665 = vmatprep.subr.mxu0 0.0
        %666 = vmatpush1.msra.mxu0 %v510
        %667 = vmatprep.subr.mxu0 0.0
        %668 = vmatpush1.msra.mxu0 %v511
        %669 = vmatprep.subr.mxu0 0.0
        %670 = vmatpush1.msra.mxu0 %v512
        %671 = vmatprep.subr.mxu0 0.0
        %672 = vmatpush1.msra.mxu0 %v513
        %673 = vmatprep.subr.mxu0 0.0
        %674 = vmatpush1.msra.mxu0 %v514
        %675 = vmatprep.subr.mxu0 0.0
        %676 = vmatpush1.msra.mxu0 %v515
        %677 = vmatprep.subr.mxu0 0.0
        %678 = vmatpush1.msra.mxu0 %v516
        %679 = vmatprep.subr.mxu0 0.0
        %680 = vmatpush1.msra.mxu0 %v517
        %681 = vmatprep.subr.mxu0 0.0
        %682 = vmatpush1.msra.mxu0 %v518
        %683 = vmatprep.subr.mxu0 0.0
        %684 = vmatpush1.msra.mxu0 %v519
        %685 = vmatprep.subr.mxu0 0.0
        %686 = vmatpush1.msra.mxu0 %v520
        %687 = vmatprep.subr.mxu0 0.0
        %688 = vmatpush1.msra.mxu0 %v521
        %689 = vmatprep.subr.mxu0 0.0
        %690 = vmatpush1.msra.mxu0 %v522
        %691 = vmatprep.subr.mxu0 0.0
        %692 = vmatpush1.msra.mxu0 0.0
        %693 = vmatprep.subr.mxu0 0.0
        %694 = vmatpush1.msra.mxu0 0.0
        %695 = vmatprep.subr.mxu0 0.0
        %696 = vmatpush1.msra.mxu0 0.0
        %697 = vmatprep.subr.mxu0 0.0
        %698 = vmatpush1.msra.mxu0 0.0
        %699 = vmatprep.subr.mxu0 0.0
        %700 = vmatpush1.msra.mxu0 0.0
        %701 = vmatprep.subr.mxu0 0.0
        %702 = vmatpush1.msra.mxu0 0.0
        %703 = vmatprep.subr.mxu0 0.0
        %704 = vmatpush1.msra.mxu0 0.0
        %705 = vmatprep.subr.mxu0 0.0
        %706 = vmatpush1.msra.mxu0 0.0
        %707 = vmatprep.subr.mxu0 0.0
        %708 = vmatpush1.msra.mxu0 0.0
        %709 = vmatprep.subr.mxu0 0.0
        %710 = vmatpush1.msra.mxu0 0.0
        %711 = vmatprep.subr.mxu0 0.0
        %712 = vmatpush1.msra.mxu0 0.0
        %713 = vmatprep.subr.mxu0 0.0
        %714 = vmatpush1.msra.mxu0 0.0
        %715 = vmatprep.subr.mxu0 0.0
        %716 = vmatpush1.msra.mxu0 0.0
        %717 = vmatprep.subr.mxu0 0.0
        %718 = vmatpush1.msra.mxu0 0.0
        %719 = vmatprep.subr.mxu0 0.0
        %720 = vmatpush1.msra.mxu0 0.0
        %721 = vmatprep.subr.mxu0 0.0
        %722 = vmatpush1.msra.mxu0 0.0
        %723 = vmatprep.mubr.f32.mxu0 0.0
        %724 = vmatmul.mubr.f32.gmra.mrb[0].mxu0 %v491
        %v725 = vpop.f32.mrb[0].mxu0
        %v726 = vadd.f32 %v607, %v725
        %v727 = vpop.f32.mrb[0].mxu0
        %728 = vmatprep.mubr.f32.mxu0 0.0
        %729 = vmatmul.mubr.f32.gmra.mrb[0].mxu0 %v492
        %v730 = vpop.f32.mrb[0].mxu0
        %v731 = vadd.f32 %v612, %v730
        %v732 = vpop.f32.mrb[0].mxu0
        %733 = vmatprep.mubr.f32.mxu0 0.0
        %734 = vmatmul.mubr.f32.gmra.mrb[0].mxu0 %v493
        %v735 = vpop.f32.mrb[0].mxu0
        %v736 = vadd.f32 %v617, %v735
        %v737 = vpop.f32.mrb[0].mxu0
        %738 = vmatprep.mubr.f32.mxu0 0.0
        %739 = vmatmul.mubr.f32.gmra.mrb[0].mxu0 %v494
        %v740 = vpop.f32.mrb[0].mxu0
        %v741 = vadd.f32 %v622, %v740
        %v742 = vpop.f32.mrb[0].mxu0
        %743 = vmatprep.mubr.f32.mxu0 0.0
        %744 = vmatmul.mubr.f32.gmra.mrb[0].mxu0 %v495
        %v745 = vpop.f32.mrb[0].mxu0
        %v746 = vadd.f32 %v627, %v745
        %v747 = vpop.f32.mrb[0].mxu0
        %748 = vmatprep.mubr.f32.mxu0 0.0
        %749 = vmatmul.mubr.f32.gmra.mrb[0].mxu0 %v496
        %v750 = vpop.f32.mrb[0].mxu0
        %v751 = vadd.f32 %v632, %v750
        %v752 = vpop.f32.mrb[0].mxu0
        %753 = vmatprep.mubr.f32.mxu0 0.0
        %754 = vmatmul.mubr.f32.gmra.mrb[0].mxu0 %v497
        %v755 = vpop.f32.mrb[0].mxu0
        %v756 = vadd.f32 %v637, %v755
        %v757 = vpop.f32.mrb[0].mxu0
        %758 = vmatprep.mubr.f32.mxu0 0.0
        %759 = vmatmul.mubr.f32.gmra.mrb[0].mxu0 %v498
        %v760 = vpop.f32.mrb[0].mxu0
        %v761 = vadd.f32 %v642, %v760
        %v762 = vpop.f32.mrb[0].mxu0
        %763 = vmatprep.mubr.f32.mxu0 0.0
        %764 = vmatmul.mubr.f32.gmra.mrb[0].mxu0 %v499
        %v765 = vpop.f32.mrb[0].mxu0
        %v766 = vadd.f32 %v647, %v765
        %v767 = vpop.f32.mrb[0].mxu0
        %768 = vmatprep.mubr.f32.mxu0 0.0
        %769 = vmatmul.mubr.f32.gmra.mrb[0].mxu0 %v500
        %v770 = vpop.f32.mrb[0].mxu0
        %v771 = vadd.f32 %v652, %v770
        %v772 = vpop.f32.mrb[0].mxu0
        %773 = vmatprep.mubr.f32.mxu0 0.0
        %774 = vmatmul.mubr.f32.gmra.mrb[0].mxu0 %v501
        %v775 = vpop.f32.mrb[0].mxu0
        %v776 = vpop.f32.mrb[0].mxu0
        %777 = vdwg.mxu0
        %s778 = scalar_lea.vmem [#allocation5], 384
        %v779 = vld [vmem:[%s778] sm:$0xff]
        %v780 = vld [vmem:[%s778 + $0x8] sm:$0xff]
        %v781 = vld [vmem:[%s778 + $0x10] sm:$0xff]
        %v782 = vld [vmem:[%s778 + $0x18] sm:$0xff]
        %v783 = vld [vmem:[%s778 + $0x20] sm:$0xff]
        %v784 = vld [vmem:[%s778 + $0x28] sm:$0xff]
        %v785 = vld [vmem:[%s778 + $0x30] sm:$0xff]
        %v786 = vld [vmem:[%s778 + $0x38] sm:$0xff]
        %v787 = vld [vmem:[%s778 + $0x40] sm:$0xff]
        %v788 = vld [vmem:[%s778 + $0x48] sm:$0xff]
        %v789 = vld [vmem:[%s778 + $0x50] sm:$0xff]
        %v790 = vld [vmem:[%s778 + $0x58] sm:$0xff]
        %v791 = vld [vmem:[%s778 + $0x60] sm:$0xff]
        %v792 = vld [vmem:[%s778 + $0x68] sm:$0xff]
        %v793 = vld [vmem:[%s778 + $0x70] sm:$0xff]
        %v794 = vld [vmem:[%s778 + $0x78] sm:$0xff]
        %795 = vmatprep.subr.mxu0 0.0
        %796 = vmatpush1.msra.mxu0 %v779
        %797 = vmatprep.subr.mxu0 0.0
        %798 = vmatpush1.msra.mxu0 %v780
        %799 = vmatprep.subr.mxu0 0.0
        %800 = vmatpush1.msra.mxu0 %v781
        %801 = vmatprep.subr.mxu0 0.0
        %802 = vmatpush1.msra.mxu0 %v782
        %803 = vmatprep.subr.mxu0 0.0
        %804 = vmatpush1.msra.mxu0 %v783
        %805 = vmatprep.subr.mxu0 0.0
        %806 = vmatpush1.msra.mxu0 %v784
        %807 = vmatprep.subr.mxu0 0.0
        %808 = vmatpush1.msra.mxu0 %v785
        %809 = vmatprep.subr.mxu0 0.0
        %810 = vmatpush1.msra.mxu0 %v786
        %811 = vmatprep.subr.mxu0 0.0
        %812 = vmatpush1.msra.mxu0 %v787
        %813 = vmatprep.subr.mxu0 0.0
        %814 = vmatpush1.msra.mxu0 %v788
        %815 = vmatprep.subr.mxu0 0.0
        %816 = vmatpush1.msra.mxu0 %v789
        %817 = vmatprep.subr.mxu0 0.0
        %818 = vmatpush1.msra.mxu0 %v790
        %819 = vmatprep.subr.mxu0 0.0
        %820 = vmatpush1.msra.mxu0 %v791
        %821 = vmatprep.subr.mxu0 0.0
        %822 = vmatpush1.msra.mxu0 %v792
        %823 = vmatprep.subr.mxu0 0.0
        %824 = vmatpush1.msra.mxu0 %v793
        %825 = vmatprep.subr.mxu0 0.0
        %826 = vmatpush1.msra.mxu0 %v794
        %827 = vmatprep.subr.mxu0 0.0
        %828 = vmatpush1.msra.mxu0 0.0
        %829 = vmatprep.subr.mxu0 0.0
        %830 = vmatpush1.msra.mxu0 0.0
        %831 = vmatprep.subr.mxu0 0.0
        %832 = vmatpush1.msra.mxu0 0.0
        %833 = vmatprep.subr.mxu0 0.0
        %834 = vmatpush1.msra.mxu0 0.0
        %835 = vmatprep.subr.mxu0 0.0
        %836 = vmatpush1.msra.mxu0 0.0
        %837 = vmatprep.subr.mxu0 0.0
        %838 = vmatpush1.msra.mxu0 0.0
        %839 = vmatprep.subr.mxu0 0.0
        %840 = vmatpush1.msra.mxu0 0.0
        %841 = vmatprep.subr.mxu0 0.0
        %842 = vmatpush1.msra.mxu0 0.0
        %843 = vmatprep.subr.mxu0 0.0
        %844 = vmatpush1.msra.mxu0 0.0
        %845 = vmatprep.subr.mxu0 0.0
        %846 = vmatpush1.msra.mxu0 0.0
        %847 = vmatprep.subr.mxu0 0.0
        %848 = vmatpush1.msra.mxu0 0.0
        %849 = vmatprep.subr.mxu0 0.0
        %850 = vmatpush1.msra.mxu0 0.0
        %851 = vmatprep.subr.mxu0 0.0
        %852 = vmatpush1.msra.mxu0 0.0
        %853 = vmatprep.subr.mxu0 0.0
        %854 = vmatpush1.msra.mxu0 0.0
        %855 = vmatprep.subr.mxu0 0.0
        %856 = vmatpush1.msra.mxu0 0.0
        %857 = vmatprep.subr.mxu0 0.0
        %858 = vmatpush1.msra.mxu0 0.0
        %859 = vmatprep.mubr.f32.mxu0 0.0
        %860 = vmatmul.mubr.f32.gmra.mrb[0].mxu0 %v493
        %v861 = vpop.f32.mrb[0].mxu0
        %v862 = vadd.f32 0.0, %v861
        %v863 = vpop.f32.mrb[0].mxu0
        %864 = vmatprep.mubr.f32.mxu0 0.0
        %865 = vmatmul.mubr.f32.gmra.mrb[0].mxu0 %v494
        %v866 = vpop.f32.mrb[0].mxu0
        %v867 = vadd.f32 0.0, %v866
        %v868 = vpop.f32.mrb[0].mxu0
        %869 = vmatprep.mubr.f32.mxu0 0.0
        %870 = vmatmul.mubr.f32.gmra.mrb[0].mxu0 %v495
        %v871 = vpop.f32.mrb[0].mxu0
        %v872 = vadd.f32 0.0, %v871
        %v873 = vpop.f32.mrb[0].mxu0
        %874 = vmatprep.mubr.f32.mxu0 0.0
        %875 = vmatmul.mubr.f32.gmra.mrb[0].mxu0 %v496
        %v876 = vpop.f32.mrb[0].mxu0
        %v877 = vadd.f32 0.0, %v876
        %v878 = vpop.f32.mrb[0].mxu0
        %879 = vmatprep.mubr.f32.mxu0 0.0
        %880 = vmatmul.mubr.f32.gmra.mrb[0].mxu0 %v497
        %v881 = vpop.f32.mrb[0].mxu0
        %v882 = vadd.f32 0.0, %v881
        %v883 = vpop.f32.mrb[0].mxu0
        %884 = vmatprep.mubr.f32.mxu0 0.0
        %885 = vmatmul.mubr.f32.gmra.mrb[0].mxu0 %v498
        %v886 = vpop.f32.mrb[0].mxu0
        %v887 = vadd.f32 0.0, %v886
        %v888 = vpop.f32.mrb[0].mxu0
        %889 = vmatprep.mubr.f32.mxu0 0.0
        %890 = vmatmul.mubr.f32.gmra.mrb[0].mxu0 %v499
        %v891 = vpop.f32.mrb[0].mxu0
        %v892 = vadd.f32 0.0, %v891
        %v893 = vpop.f32.mrb[0].mxu0
        %894 = vmatprep.mubr.f32.mxu0 0.0
        %895 = vmatmul.mubr.f32.gmra.mrb[0].mxu0 %v500
        %v896 = vpop.f32.mrb[0].mxu0
        %v897 = vadd.f32 0.0, %v896
        %v898 = vpop.f32.mrb[0].mxu0
        %899 = vmatprep.mubr.f32.mxu0 0.0
        %900 = vmatmul.mubr.f32.gmra.mrb[0].mxu0 %v501
        %v901 = vpop.f32.mrb[0].mxu0
        %v902 = vadd.f32 0.0, %v901
        %v903 = vpop.f32.mrb[0].mxu0
        %904 = vmatprep.mubr.f32.mxu0 0.0
        %905 = vmatmul.mubr.f32.gmra.mrb[0].mxu0 %v502
        %v906 = vpop.f32.mrb[0].mxu0
        %v907 = vadd.f32 0.0, %v906
        %v908 = vpop.f32.mrb[0].mxu0
        %909 = vmatprep.mubr.f32.mxu0 0.0
        %910 = vmatmul.mubr.f32.gmra.mrb[0].mxu0 %v503
        %v911 = vpop.f32.mrb[0].mxu0
        %v912 = vpop.f32.mrb[0].mxu0
        %913 = vdwg.mxu0
        %v914 = vadd.f32 %v726, %v862
        %v915 = vadd.f32 %v731, %v867
        %v916 = vadd.f32 %v736, %v872
        %v917 = vadd.f32 %v741, %v877
        %v918 = vadd.f32 %v746, %v882
        %v919 = vadd.f32 %v751, %v887
        %v920 = vadd.f32 %v756, %v892
        %v921 = vadd.f32 %v761, %v897
        %v922 = vadd.f32 %v766, %v902
        %v923 = vadd.f32 %v771, %v907
        %s924 = scalar_lea.vmem [#allocation5], 512
        %v925 = vld [vmem:[%s924] sm:$0xff]
        %v926 = vld [vmem:[%s924 + $0x8] sm:$0xff]
        %v927 = vld [vmem:[%s924 + $0x10] sm:$0xff]
        %v928 = vld [vmem:[%s924 + $0x18] sm:$0xff]
        %v929 = vld [vmem:[%s924 + $0x20] sm:$0xff]
        %v930 = vld [vmem:[%s924 + $0x28] sm:$0xff]
        %v931 = vld [vmem:[%s924 + $0x30] sm:$0xff]
        %v932 = vld [vmem:[%s924 + $0x38] sm:$0xff]
        %v933 = vld [vmem:[%s924 + $0x40] sm:$0xff]
        %v934 = vld [vmem:[%s924 + $0x48] sm:$0xff]
        %v935 = vld [vmem:[%s924 + $0x50] sm:$0xff]
        %v936 = vld [vmem:[%s924 + $0x58] sm:$0xff]
        %v937 = vld [vmem:[%s924 + $0x60] sm:$0xff]
        %v938 = vld [vmem:[%s924 + $0x68] sm:$0xff]
        %v939 = vld [vmem:[%s924 + $0x70] sm:$0xff]
        %v940 = vld [vmem:[%s924 + $0x78] sm:$0xff]
        %941 = vmatprep.subr.mxu0 0.0
        %942 = vmatpush1.msra.mxu0 %v925
        %943 = vmatprep.subr.mxu0 0.0
        %944 = vmatpush1.msra.mxu0 %v926
        %945 = vmatprep.subr.mxu0 0.0
        %946 = vmatpush1.msra.mxu0 %v927
        %947 = vmatprep.subr.mxu0 0.0
        %948 = vmatpush1.msra.mxu0 %v928
        %949 = vmatprep.subr.mxu0 0.0
        %950 = vmatpush1.msra.mxu0 %v929
        %951 = vmatprep.subr.mxu0 0.0
        %952 = vmatpush1.msra.mxu0 %v930
        %953 = vmatprep.subr.mxu0 0.0
        %954 = vmatpush1.msra.mxu0 %v931
        %955 = vmatprep.subr.mxu0 0.0
        %956 = vmatpush1.msra.mxu0 %v932
        %957 = vmatprep.subr.mxu0 0.0
        %958 = vmatpush1.msra.mxu0 %v933
        %959 = vmatprep.subr.mxu0 0.0
        %960 = vmatpush1.msra.mxu0 %v934
        %961 = vmatprep.subr.mxu0 0.0
        %962 = vmatpush1.msra.mxu0 %v935
        %963 = vmatprep.subr.mxu0 0.0
        %964 = vmatpush1.msra.mxu0 %v936
        %965 = vmatprep.subr.mxu0 0.0
        %966 = vmatpush1.msra.mxu0 %v937
        %967 = vmatprep.subr.mxu0 0.0
        %968 = vmatpush1.msra.mxu0 %v938
        %969 = vmatprep.subr.mxu0 0.0
        %970 = vmatpush1.msra.mxu0 %v939
        %971 = vmatprep.subr.mxu0 0.0
        %972 = vmatpush1.msra.mxu0 %v940
        %973 = vmatprep.subr.mxu0 0.0
        %974 = vmatpush1.msra.mxu0 0.0
        %975 = vmatprep.subr.mxu0 0.0
        %976 = vmatpush1.msra.mxu0 0.0
        %977 = vmatprep.subr.mxu0 0.0
        %978 = vmatpush1.msra.mxu0 0.0
        %979 = vmatprep.subr.mxu0 0.0
        %980 = vmatpush1.msra.mxu0 0.0
        %981 = vmatprep.subr.mxu0 0.0
        %982 = vmatpush1.msra.mxu0 0.0
        %983 = vmatprep.subr.mxu0 0.0
        %984 = vmatpush1.msra.mxu0 0.0
        %985 = vmatprep.subr.mxu0 0.0
        %986 = vmatpush1.msra.mxu0 0.0
        %987 = vmatprep.subr.mxu0 0.0
        %988 = vmatpush1.msra.mxu0 0.0
        %989 = vmatprep.subr.mxu0 0.0
        %990 = vmatpush1.msra.mxu0 0.0
        %991 = vmatprep.subr.mxu0 0.0
        %992 = vmatpush1.msra.mxu0 0.0
        %993 = vmatprep.subr.mxu0 0.0
        %994 = vmatpush1.msra.mxu0 0.0
        %995 = vmatprep.subr.mxu0 0.0
        %996 = vmatpush1.msra.mxu0 0.0
        %997 = vmatprep.subr.mxu0 0.0
        %998 = vmatpush1.msra.mxu0 0.0
        %999 = vmatprep.subr.mxu0 0.0
        %1000 = vmatpush1.msra.mxu0 0.0
        %1001 = vmatprep.subr.mxu0 0.0
        %1002 = vmatpush1.msra.mxu0 0.0
        %1003 = vmatprep.subr.mxu0 0.0
        %1004 = vmatpush1.msra.mxu0 0.0
        %1005 = vmatprep.mubr.f32.mxu0 0.0
        %1006 = vmatmul.mubr.f32.gmra.mrb[0].mxu0 %v494
        %v1007 = vpop.f32.mrb[0].mxu0
        %v1008 = vadd.f32 0.0, %v1007
        %v1009 = vpop.f32.mrb[0].mxu0
        %1010 = vmatprep.mubr.f32.mxu0 0.0
        %1011 = vmatmul.mubr.f32.gmra.mrb[0].mxu0 %v495
        %v1012 = vpop.f32.mrb[0].mxu0
        %v1013 = vadd.f32 0.0, %v1012
        %v1014 = vpop.f32.mrb[0].mxu0
        %1015 = vmatprep.mubr.f32.mxu0 0.0
        %1016 = vmatmul.mubr.f32.gmra.mrb[0].mxu0 %v496
        %v1017 = vpop.f32.mrb[0].mxu0
        %v1018 = vadd.f32 0.0, %v1017
        %v1019 = vpop.f32.mrb[0].mxu0
        %1020 = vmatprep.mubr.f32.mxu0 0.0
        %1021 = vmatmul.mubr.f32.gmra.mrb[0].mxu0 %v497
        %v1022 = vpop.f32.mrb[0].mxu0
        %v1023 = vadd.f32 0.0, %v1022
        %v1024 = vpop.f32.mrb[0].mxu0
        %1025 = vmatprep.mubr.f32.mxu0 0.0
        %1026 = vmatmul.mubr.f32.gmra.mrb[0].mxu0 %v498
        %v1027 = vpop.f32.mrb[0].mxu0
        %v1028 = vadd.f32 0.0, %v1027
        %v1029 = vpop.f32.mrb[0].mxu0
        %1030 = vmatprep.mubr.f32.mxu0 0.0
        %1031 = vmatmul.mubr.f32.gmra.mrb[0].mxu0 %v499
        %v1032 = vpop.f32.mrb[0].mxu0
        %v1033 = vadd.f32 0.0, %v1032
        %v1034 = vpop.f32.mrb[0].mxu0
        %1035 = vmatprep.mubr.f32.mxu0 0.0
        %1036 = vmatmul.mubr.f32.gmra.mrb[0].mxu0 %v500
        %v1037 = vpop.f32.mrb[0].mxu0
        %v1038 = vadd.f32 0.0, %v1037
        %v1039 = vpop.f32.mrb[0].mxu0
        %1040 = vmatprep.mubr.f32.mxu0 0.0
        %1041 = vmatmul.mubr.f32.gmra.mrb[0].mxu0 %v501
        %v1042 = vpop.f32.mrb[0].mxu0
        %v1043 = vadd.f32 0.0, %v1042
        %v1044 = vpop.f32.mrb[0].mxu0
        %1045 = vmatprep.mubr.f32.mxu0 0.0
        %1046 = vmatmul.mubr.f32.gmra.mrb[0].mxu0 %v502
        %v1047 = vpop.f32.mrb[0].mxu0
        %v1048 = vadd.f32 0.0, %v1047
        %v1049 = vpop.f32.mrb[0].mxu0
        %1050 = vmatprep.mubr.f32.mxu0 0.0
        %1051 = vmatmul.mubr.f32.gmra.mrb[0].mxu0 %v503
        %v1052 = vpop.f32.mrb[0].mxu0
        %v1053 = vadd.f32 0.0, %v1052
        %v1054 = vpop.f32.mrb[0].mxu0
        %1055 = vmatprep.mubr.f32.mxu0 0.0
        %1056 = vmatmul.mubr.f32.gmra.mrb[0].mxu0 %v504
        %v1057 = vpop.f32.mrb[0].mxu0
        %v1058 = vpop.f32.mrb[0].mxu0
        %1059 = vdwg.mxu0
        %v1060 = vadd.f32 %v914, %v1008
        %v1061 = vadd.f32 %v915, %v1013
        %v1062 = vadd.f32 %v916, %v1018
        %v1063 = vadd.f32 %v917, %v1023
        %v1064 = vadd.f32 %v918, %v1028
        %v1065 = vadd.f32 %v919, %v1033
        %v1066 = vadd.f32 %v920, %v1038
        %v1067 = vadd.f32 %v921, %v1043
        %v1068 = vadd.f32 %v922, %v1048
        %v1069 = vadd.f32 %v923, %v1053
        %v1070 = vlaneseq
        %v1071 = vshrl.u32 %v1070, 7
        %v1072 = vsub.s32 0, %v1071
        %v1073 = vrot.slane %v505, %v1072
        %v1074 = vadd.f32 %v1060, %v1073
        %v1075 = vadd.f32 %v1061, %v1073
        %v1076 = vadd.f32 %v1062, %v1073
        %v1077 = vadd.f32 %v1063, %v1073
        %v1078 = vadd.f32 %v1064, %v1073
        %v1079 = vadd.f32 %v1065, %v1073
        %v1080 = vadd.f32 %v1066, %v1073
        %v1081 = vadd.f32 %v1067, %v1073
        %v1082 = vadd.f32 %v1068, %v1073
        %v1083 = vadd.f32 %v1069, %v1073
        %v1084 = vmax.f32 %v1074, 0.0
        %v1085 = vmax.f32 %v1075, 0.0
        %v1086 = vmax.f32 %v1076, 0.0
        %v1087 = vmax.f32 %v1077, 0.0
        %v1088 = vmax.f32 %v1078, 0.0
        %v1089 = vmax.f32 %v1079, 0.0
        %v1090 = vmax.f32 %v1080, 0.0
        %v1091 = vmax.f32 %v1081, 0.0
        %v1092 = vmax.f32 %v1082, 0.0
        %v1093 = vmax.f32 %v1083, 0.0
        %v1094 = vmax.f32 %v1084, %v1085
        %v1095 = vmax.f32 %v1086, %v1087
        %v1096 = vmax.f32 %v1088, %v1089
        %v1097 = vmax.f32 %v1090, %v1091
        %v1098 = vmax.f32 %v1092, %v1093
        %v1099 = vld [vmem:[%s2 + $0x2] sm:$0x1]
        %s1100 = scalar_lea.vmem [#allocation5], 640
        %v1101 = vld [vmem:[%s1100] sm:$0xff]
        %v1102 = vld [vmem:[%s1100 + $0x8] sm:$0xff]
        %v1103 = vld [vmem:[%s1100 + $0x10] sm:$0xff]
        %v1104 = vld [vmem:[%s1100 + $0x18] sm:$0xff]
        %v1105 = vld [vmem:[%s1100 + $0x20] sm:$0xff]
        %v1106 = vld [vmem:[%s1100 + $0x28] sm:$0xff]
        %v1107 = vld [vmem:[%s1100 + $0x30] sm:$0xff]
        %v1108 = vld [vmem:[%s1100 + $0x38] sm:$0xff]
        %v1109 = vld [vmem:[%s1100 + $0x40] sm:$0xff]
        %v1110 = vld [vmem:[%s1100 + $0x48] sm:$0xff]
        %v1111 = vld [vmem:[%s1100 + $0x50] sm:$0xff]
        %v1112 = vld [vmem:[%s1100 + $0x58] sm:$0xff]
        %v1113 = vld [vmem:[%s1100 + $0x60] sm:$0xff]
        %v1114 = vld [vmem:[%s1100 + $0x68] sm:$0xff]
        %v1115 = vld [vmem:[%s1100 + $0x70] sm:$0xff]
        %v1116 = vld [vmem:[%s1100 + $0x78] sm:$0xff]
        %s1117 = scalar_lea.vmem [#allocation5], 768
        %v1118 = vld [vmem:[%s1117] sm:$0xff]
        %v1119 = vld [vmem:[%s1117 + $0x8] sm:$0xff]
        %v1120 = vld [vmem:[%s1117 + $0x10] sm:$0xff]
        %v1121 = vld [vmem:[%s1117 + $0x18] sm:$0xff]
        %v1122 = vld [vmem:[%s1117 + $0x20] sm:$0xff]
        %v1123 = vld [vmem:[%s1117 + $0x28] sm:$0xff]
        %v1124 = vld [vmem:[%s1117 + $0x30] sm:$0xff]
        %v1125 = vld [vmem:[%s1117 + $0x38] sm:$0xff]
        %v1126 = vld [vmem:[%s1117 + $0x40] sm:$0xff]
        %v1127 = vld [vmem:[%s1117 + $0x48] sm:$0xff]
        %v1128 = vld [vmem:[%s1117 + $0x50] sm:$0xff]
        %v1129 = vld [vmem:[%s1117 + $0x58] sm:$0xff]
        %v1130 = vld [vmem:[%s1117 + $0x60] sm:$0xff]
        %v1131 = vld [vmem:[%s1117 + $0x68] sm:$0xff]
        %v1132 = vld [vmem:[%s1117 + $0x70] sm:$0xff]
        %v1133 = vld [vmem:[%s1117 + $0x78] sm:$0xff]
        %1134 = vmatprep.subr.mxu0 0.0
        %1135 = vmatpush1.msra.mxu0 %v1118
        %1136 = vmatprep.subr.mxu0 0.0
        %1137 = vmatpush1.msra.mxu0 %v1119
        %1138 = vmatprep.subr.mxu0 0.0
        %1139 = vmatpush1.msra.mxu0 %v1120
        %1140 = vmatprep.subr.mxu0 0.0
        %1141 = vmatpush1.msra.mxu0 %v1121
        %1142 = vmatprep.subr.mxu0 0.0
        %1143 = vmatpush1.msra.mxu0 %v1122
        %1144 = vmatprep.subr.mxu0 0.0
        %1145 = vmatpush1.msra.mxu0 %v1123
        %1146 = vmatprep.subr.mxu0 0.0
        %1147 = vmatpush1.msra.mxu0 %v1124
        %1148 = vmatprep.subr.mxu0 0.0
        %1149 = vmatpush1.msra.mxu0 %v1125
        %1150 = vmatprep.subr.mxu0 0.0
        %1151 = vmatpush1.msra.mxu0 %v1126
        %1152 = vmatprep.subr.mxu0 0.0
        %1153 = vmatpush1.msra.mxu0 %v1127
        %1154 = vmatprep.subr.mxu0 0.0
        %1155 = vmatpush1.msra.mxu0 %v1128
        %1156 = vmatprep.subr.mxu0 0.0
        %1157 = vmatpush1.msra.mxu0 %v1129
        %1158 = vmatprep.subr.mxu0 0.0
        %1159 = vmatpush1.msra.mxu0 %v1130
        %1160 = vmatprep.subr.mxu0 0.0
        %1161 = vmatpush1.msra.mxu0 %v1131
        %1162 = vmatprep.subr.mxu0 0.0
        %1163 = vmatpush1.msra.mxu0 %v1132
        %1164 = vmatprep.subr.mxu0 0.0
        %1165 = vmatpush1.msra.mxu0 %v1133
        %1166 = vmatprep.subr.mxu0 0.0
        %1167 = vmatpush1.msra.mxu0 0.0
        %1168 = vmatprep.subr.mxu0 0.0
        %1169 = vmatpush1.msra.mxu0 0.0
        %1170 = vmatprep.subr.mxu0 0.0
        %1171 = vmatpush1.msra.mxu0 0.0
        %1172 = vmatprep.subr.mxu0 0.0
        %1173 = vmatpush1.msra.mxu0 0.0
        %1174 = vmatprep.subr.mxu0 0.0
        %1175 = vmatpush1.msra.mxu0 0.0
        %1176 = vmatprep.subr.mxu0 0.0
        %1177 = vmatpush1.msra.mxu0 0.0
        %1178 = vmatprep.subr.mxu0 0.0
        %1179 = vmatpush1.msra.mxu0 0.0
        %1180 = vmatprep.subr.mxu0 0.0
        %1181 = vmatpush1.msra.mxu0 0.0
        %1182 = vmatprep.subr.mxu0 0.0
        %1183 = vmatpush1.msra.mxu0 0.0
        %1184 = vmatprep.subr.mxu0 0.0
        %1185 = vmatpush1.msra.mxu0 0.0
        %1186 = vmatprep.subr.mxu0 0.0
        %1187 = vmatpush1.msra.mxu0 0.0
        %1188 = vmatprep.subr.mxu0 0.0
        %1189 = vmatpush1.msra.mxu0 0.0
        %1190 = vmatprep.subr.mxu0 0.0
        %1191 = vmatpush1.msra.mxu0 0.0
        %1192 = vmatprep.subr.mxu0 0.0
        %1193 = vmatpush1.msra.mxu0 0.0
        %1194 = vmatprep.subr.mxu0 0.0
        %1195 = vmatpush1.msra.mxu0 0.0
        %1196 = vmatprep.subr.mxu0 0.0
        %1197 = vmatpush1.msra.mxu0 0.0
        %1198 = vmatprep.mubr.f32.mxu0 0.0
        %1199 = vmatmul.mubr.f32.gmra.mrb[0].mxu0 %v1095
        %v1200 = vpop.f32.mrb[0].mxu0
        %v1201 = vadd.f32 0.0, %v1200
        %v1202 = vpop.f32.mrb[0].mxu0
        %1203 = vmatprep.mubr.f32.mxu0 0.0
        %1204 = vmatmul.mubr.f32.gmra.mrb[0].mxu0 %v1096
        %v1205 = vpop.f32.mrb[0].mxu0
        %v1206 = vadd.f32 0.0, %v1205
        %v1207 = vpop.f32.mrb[0].mxu0
        %1208 = vdwg.mxu0
        %1209 = vmatprep.subr.mxu0 0.0
        %1210 = vmatpush1.msra.mxu0 %v1101
        %1211 = vmatprep.subr.mxu0 0.0
        %1212 = vmatpush1.msra.mxu0 %v1102
        %1213 = vmatprep.subr.mxu0 0.0
        %1214 = vmatpush1.msra.mxu0 %v1103
        %1215 = vmatprep.subr.mxu0 0.0
        %1216 = vmatpush1.msra.mxu0 %v1104
        %1217 = vmatprep.subr.mxu0 0.0
        %1218 = vmatpush1.msra.mxu0 %v1105
        %1219 = vmatprep.subr.mxu0 0.0
        %1220 = vmatpush1.msra.mxu0 %v1106
        %1221 = vmatprep.subr.mxu0 0.0
        %1222 = vmatpush1.msra.mxu0 %v1107
        %1223 = vmatprep.subr.mxu0 0.0
        %1224 = vmatpush1.msra.mxu0 %v1108
        %1225 = vmatprep.subr.mxu0 0.0
        %1226 = vmatpush1.msra.mxu0 %v1109
        %1227 = vmatprep.subr.mxu0 0.0
        %1228 = vmatpush1.msra.mxu0 %v1110
        %1229 = vmatprep.subr.mxu0 0.0
        %1230 = vmatpush1.msra.mxu0 %v1111
        %1231 = vmatprep.subr.mxu0 0.0
        %1232 = vmatpush1.msra.mxu0 %v1112
        %1233 = vmatprep.subr.mxu0 0.0
        %1234 = vmatpush1.msra.mxu0 %v1113
        %1235 = vmatprep.subr.mxu0 0.0
        %1236 = vmatpush1.msra.mxu0 %v1114
        %1237 = vmatprep.subr.mxu0 0.0
        %1238 = vmatpush1.msra.mxu0 %v1115
        %1239 = vmatprep.subr.mxu0 0.0
        %1240 = vmatpush1.msra.mxu0 %v1116
        %1241 = vmatprep.subr.mxu0 0.0
        %1242 = vmatpush1.msra.mxu0 0.0
        %1243 = vmatprep.subr.mxu0 0.0
        %1244 = vmatpush1.msra.mxu0 0.0
        %1245 = vmatprep.subr.mxu0 0.0
        %1246 = vmatpush1.msra.mxu0 0.0
        %1247 = vmatprep.subr.mxu0 0.0
        %1248 = vmatpush1.msra.mxu0 0.0
        %1249 = vmatprep.subr.mxu0 0.0
        %1250 = vmatpush1.msra.mxu0 0.0
        %1251 = vmatprep.subr.mxu0 0.0
        %1252 = vmatpush1.msra.mxu0 0.0
        %1253 = vmatprep.subr.mxu0 0.0
        %1254 = vmatpush1.msra.mxu0 0.0
        %1255 = vmatprep.subr.mxu0 0.0
        %1256 = vmatpush1.msra.mxu0 0.0
        %1257 = vmatprep.subr.mxu0 0.0
        %1258 = vmatpush1.msra.mxu0 0.0
        %1259 = vmatprep.subr.mxu0 0.0
        %1260 = vmatpush1.msra.mxu0 0.0
        %1261 = vmatprep.subr.mxu0 0.0
        %1262 = vmatpush1.msra.mxu0 0.0
        %1263 = vmatprep.subr.mxu0 0.0
        %1264 = vmatpush1.msra.mxu0 0.0
        %1265 = vmatprep.subr.mxu0 0.0
        %1266 = vmatpush1.msra.mxu0 0.0
        %1267 = vmatprep.subr.mxu0 0.0
        %1268 = vmatpush1.msra.mxu0 0.0
        %1269 = vmatprep.subr.mxu0 0.0
        %1270 = vmatpush1.msra.mxu0 0.0
        %1271 = vmatprep.subr.mxu0 0.0
        %1272 = vmatpush1.msra.mxu0 0.0
        %1273 = vmatprep.mubr.f32.mxu0 0.0
        %1274 = vmatmul.mubr.f32.gmra.mrb[0].mxu0 %v1094
        %v1275 = vpop.f32.mrb[0].mxu0
        %v1276 = vadd.f32 %v1201, %v1275
        %v1277 = vpop.f32.mrb[0].mxu0
        %1278 = vmatprep.mubr.f32.mxu0 0.0
        %1279 = vmatmul.mubr.f32.gmra.mrb[0].mxu0 %v1095
        %v1280 = vpop.f32.mrb[0].mxu0
        %v1281 = vadd.f32 %v1206, %v1280
        %v1282 = vpop.f32.mrb[0].mxu0
        %1283 = vdwg.mxu0
        %s1284 = scalar_lea.vmem [#allocation5], 896
        %v1285 = vld [vmem:[%s1284] sm:$0xff]
        %v1286 = vld [vmem:[%s1284 + $0x8] sm:$0xff]
        %v1287 = vld [vmem:[%s1284 + $0x10] sm:$0xff]
        %v1288 = vld [vmem:[%s1284 + $0x18] sm:$0xff]
        %v1289 = vld [vmem:[%s1284 + $0x20] sm:$0xff]
        %v1290 = vld [vmem:[%s1284 + $0x28] sm:$0xff]
        %v1291 = vld [vmem:[%s1284 + $0x30] sm:$0xff]
        %v1292 = vld [vmem:[%s1284 + $0x38] sm:$0xff]
        %v1293 = vld [vmem:[%s1284 + $0x40] sm:$0xff]
        %v1294 = vld [vmem:[%s1284 + $0x48] sm:$0xff]
        %v1295 = vld [vmem:[%s1284 + $0x50] sm:$0xff]
        %v1296 = vld [vmem:[%s1284 + $0x58] sm:$0xff]
        %v1297 = vld [vmem:[%s1284 + $0x60] sm:$0xff]
        %v1298 = vld [vmem:[%s1284 + $0x68] sm:$0xff]
        %v1299 = vld [vmem:[%s1284 + $0x70] sm:$0xff]
        %v1300 = vld [vmem:[%s1284 + $0x78] sm:$0xff]
        %1301 = vmatprep.subr.mxu0 0.0
        %1302 = vmatpush1.msra.mxu0 %v1285
        %1303 = vmatprep.subr.mxu0 0.0
        %1304 = vmatpush1.msra.mxu0 %v1286
        %1305 = vmatprep.subr.mxu0 0.0
        %1306 = vmatpush1.msra.mxu0 %v1287
        %1307 = vmatprep.subr.mxu0 0.0
        %1308 = vmatpush1.msra.mxu0 %v1288
        %1309 = vmatprep.subr.mxu0 0.0
        %1310 = vmatpush1.msra.mxu0 %v1289
        %1311 = vmatprep.subr.mxu0 0.0
        %1312 = vmatpush1.msra.mxu0 %v1290
        %1313 = vmatprep.subr.mxu0 0.0
        %1314 = vmatpush1.msra.mxu0 %v1291
        %1315 = vmatprep.subr.mxu0 0.0
        %1316 = vmatpush1.msra.mxu0 %v1292
        %1317 = vmatprep.subr.mxu0 0.0
        %1318 = vmatpush1.msra.mxu0 %v1293
        %1319 = vmatprep.subr.mxu0 0.0
        %1320 = vmatpush1.msra.mxu0 %v1294
        %1321 = vmatprep.subr.mxu0 0.0
        %1322 = vmatpush1.msra.mxu0 %v1295
        %1323 = vmatprep.subr.mxu0 0.0
        %1324 = vmatpush1.msra.mxu0 %v1296
        %1325 = vmatprep.subr.mxu0 0.0
        %1326 = vmatpush1.msra.mxu0 %v1297
        %1327 = vmatprep.subr.mxu0 0.0
        %1328 = vmatpush1.msra.mxu0 %v1298
        %1329 = vmatprep.subr.mxu0 0.0
        %1330 = vmatpush1.msra.mxu0 %v1299
        %1331 = vmatprep.subr.mxu0 0.0
        %1332 = vmatpush1.msra.mxu0 %v1300
        %1333 = vmatprep.subr.mxu0 0.0
        %1334 = vmatpush1.msra.mxu0 0.0
        %1335 = vmatprep.subr.mxu0 0.0
        %1336 = vmatpush1.msra.mxu0 0.0
        %1337 = vmatprep.subr.mxu0 0.0
        %1338 = vmatpush1.msra.mxu0 0.0
        %1339 = vmatprep.subr.mxu0 0.0
        %1340 = vmatpush1.msra.mxu0 0.0
        %1341 = vmatprep.subr.mxu0 0.0
        %1342 = vmatpush1.msra.mxu0 0.0
        %1343 = vmatprep.subr.mxu0 0.0
        %1344 = vmatpush1.msra.mxu0 0.0
        %1345 = vmatprep.subr.mxu0 0.0
        %1346 = vmatpush1.msra.mxu0 0.0
        %1347 = vmatprep.subr.mxu0 0.0
        %1348 = vmatpush1.msra.mxu0 0.0
        %1349 = vmatprep.subr.mxu0 0.0
        %1350 = vmatpush1.msra.mxu0 0.0
        %1351 = vmatprep.subr.mxu0 0.0
        %1352 = vmatpush1.msra.mxu0 0.0
        %1353 = vmatprep.subr.mxu0 0.0
        %1354 = vmatpush1.msra.mxu0 0.0
        %1355 = vmatprep.subr.mxu0 0.0
        %1356 = vmatpush1.msra.mxu0 0.0
        %1357 = vmatprep.subr.mxu0 0.0
        %1358 = vmatpush1.msra.mxu0 0.0
        %1359 = vmatprep.subr.mxu0 0.0
        %1360 = vmatpush1.msra.mxu0 0.0
        %1361 = vmatprep.subr.mxu0 0.0
        %1362 = vmatpush1.msra.mxu0 0.0
        %1363 = vmatprep.subr.mxu0 0.0
        %1364 = vmatpush1.msra.mxu0 0.0
        %1365 = vmatprep.mubr.f32.mxu0 0.0
        %1366 = vmatmul.mubr.f32.gmra.mrb[0].mxu0 %v1096
        %v1367 = vpop.f32.mrb[0].mxu0
        %v1368 = vadd.f32 0.0, %v1367
        %v1369 = vpop.f32.mrb[0].mxu0
        %1370 = vmatprep.mubr.f32.mxu0 0.0
        %1371 = vmatmul.mubr.f32.gmra.mrb[0].mxu0 %v1097
        %v1372 = vpop.f32.mrb[0].mxu0
        %v1373 = vadd.f32 0.0, %v1372
        %v1374 = vpop.f32.mrb[0].mxu0
        %1375 = vdwg.mxu0
        %v1376 = vadd.f32 %v1276, %v1368
        %v1377 = vadd.f32 %v1281, %v1373
        %s1378 = scalar_lea.vmem [#allocation5], 1024
        %v1379 = vld [vmem:[%s1378] sm:$0xff]
        %v1380 = vld [vmem:[%s1378 + $0x8] sm:$0xff]
        %v1381 = vld [vmem:[%s1378 + $0x10] sm:$0xff]
        %v1382 = vld [vmem:[%s1378 + $0x18] sm:$0xff]
        %v1383 = vld [vmem:[%s1378 + $0x20] sm:$0xff]
        %v1384 = vld [vmem:[%s1378 + $0x28] sm:$0xff]
        %v1385 = vld [vmem:[%s1378 + $0x30] sm:$0xff]
        %v1386 = vld [vmem:[%s1378 + $0x38] sm:$0xff]
        %v1387 = vld [vmem:[%s1378 + $0x40] sm:$0xff]
        %v1388 = vld [vmem:[%s1378 + $0x48] sm:$0xff]
        %v1389 = vld [vmem:[%s1378 + $0x50] sm:$0xff]
        %v1390 = vld [vmem:[%s1378 + $0x58] sm:$0xff]
        %v1391 = vld [vmem:[%s1378 + $0x60] sm:$0xff]
        %v1392 = vld [vmem:[%s1378 + $0x68] sm:$0xff]
        %v1393 = vld [vmem:[%s1378 + $0x70] sm:$0xff]
        %v1394 = vld [vmem:[%s1378 + $0x78] sm:$0xff]
        %1395 = vmatprep.subr.mxu0 0.0
        %1396 = vmatpush1.msra.mxu0 %v1379
        %1397 = vmatprep.subr.mxu0 0.0
        %1398 = vmatpush1.msra.mxu0 %v1380
        %1399 = vmatprep.subr.mxu0 0.0
        %1400 = vmatpush1.msra.mxu0 %v1381
        %1401 = vmatprep.subr.mxu0 0.0
        %1402 = vmatpush1.msra.mxu0 %v1382
        %1403 = vmatprep.subr.mxu0 0.0
        %1404 = vmatpush1.msra.mxu0 %v1383
        %1405 = vmatprep.subr.mxu0 0.0
        %1406 = vmatpush1.msra.mxu0 %v1384
        %1407 = vmatprep.subr.mxu0 0.0
        %1408 = vmatpush1.msra.mxu0 %v1385
        %1409 = vmatprep.subr.mxu0 0.0
        %1410 = vmatpush1.msra.mxu0 %v1386
        %1411 = vmatprep.subr.mxu0 0.0
        %1412 = vmatpush1.msra.mxu0 %v1387
        %1413 = vmatprep.subr.mxu0 0.0
        %1414 = vmatpush1.msra.mxu0 %v1388
        %1415 = vmatprep.subr.mxu0 0.0
        %1416 = vmatpush1.msra.mxu0 %v1389
        %1417 = vmatprep.subr.mxu0 0.0
        %1418 = vmatpush1.msra.mxu0 %v1390
        %1419 = vmatprep.subr.mxu0 0.0
        %1420 = vmatpush1.msra.mxu0 %v1391
        %1421 = vmatprep.subr.mxu0 0.0
        %1422 = vmatpush1.msra.mxu0 %v1392
        %1423 = vmatprep.subr.mxu0 0.0
        %1424 = vmatpush1.msra.mxu0 %v1393
        %1425 = vmatprep.subr.mxu0 0.0
        %1426 = vmatpush1.msra.mxu0 %v1394
        %1427 = vmatprep.subr.mxu0 0.0
        %1428 = vmatpush1.msra.mxu0 0.0
        %1429 = vmatprep.subr.mxu0 0.0
        %1430 = vmatpush1.msra.mxu0 0.0
        %1431 = vmatprep.subr.mxu0 0.0
        %1432 = vmatpush1.msra.mxu0 0.0
        %1433 = vmatprep.subr.mxu0 0.0
        %1434 = vmatpush1.msra.mxu0 0.0
        %1435 = vmatprep.subr.mxu0 0.0
        %1436 = vmatpush1.msra.mxu0 0.0
        %1437 = vmatprep.subr.mxu0 0.0
        %1438 = vmatpush1.msra.mxu0 0.0
        %1439 = vmatprep.subr.mxu0 0.0
        %1440 = vmatpush1.msra.mxu0 0.0
        %1441 = vmatprep.subr.mxu0 0.0
        %1442 = vmatpush1.msra.mxu0 0.0
        %1443 = vmatprep.subr.mxu0 0.0
        %1444 = vmatpush1.msra.mxu0 0.0
        %1445 = vmatprep.subr.mxu0 0.0
        %1446 = vmatpush1.msra.mxu0 0.0
        %1447 = vmatprep.subr.mxu0 0.0
        %1448 = vmatpush1.msra.mxu0 0.0
        %1449 = vmatprep.subr.mxu0 0.0
        %1450 = vmatpush1.msra.mxu0 0.0
        %1451 = vmatprep.subr.mxu0 0.0
        %1452 = vmatpush1.msra.mxu0 0.0
        %1453 = vmatprep.subr.mxu0 0.0
        %1454 = vmatpush1.msra.mxu0 0.0
        %1455 = vmatprep.subr.mxu0 0.0
        %1456 = vmatpush1.msra.mxu0 0.0
        %1457 = vmatprep.subr.mxu0 0.0
        %1458 = vmatpush1.msra.mxu0 0.0
        %1459 = vmatprep.mubr.f32.mxu0 0.0
        %1460 = vmatmul.mubr.f32.gmra.mrb[0].mxu0 %v1097
        %v1461 = vpop.f32.mrb[0].mxu0
        %v1462 = vadd.f32 0.0, %v1461
        %v1463 = vpop.f32.mrb[0].mxu0
        %1464 = vmatprep.mubr.f32.mxu0 0.0
        %1465 = vmatmul.mubr.f32.gmra.mrb[0].mxu0 %v1098
        %v1466 = vpop.f32.mrb[0].mxu0
        %v1467 = vadd.f32 0.0, %v1466
        %v1468 = vpop.f32.mrb[0].mxu0
        %1469 = vdwg.mxu0
        %v1470 = vadd.f32 %v1376, %v1462
        %v1471 = vadd.f32 %v1377, %v1467
        %v1472 = vlaneseq
        %v1473 = vshrl.u32 %v1472, 7
        %v1474 = vsub.s32 0, %v1473
        %v1475 = vrot.slane %v1099, %v1474
        %v1476 = vadd.f32 %v1470, %v1475
        %v1477 = vadd.f32 %v1471, %v1475
        %v1478 = vadd.f32 %v1476, %v1477
        %v1479 = vrcp.pop 2.0
        %v1480 = vmul.f32 %v1478, %v1479
        %1481 = vst [vmem:[%s203] sm:$0xff] %v1480
        %s1482 = sand.u32 %s97, 1
        %s1483 = scalar_lea.sflag [#allocation4], %s1482
        %s1484 = sand.u32 %s97, 1
        %s1485 = smul.addr %s1484, 8
        %s1486 = scalar_lea.vmem [#allocation7], %s1485
        // Predicated region
        $region41: #{tpu_custom_call.1} parent=31 // pred_check
          %p1487 = pneg %p107
        $region42: #{tpu_custom_call.1} parent=31 // pred_check_branch
          %1489 = sbr.rel (%p1487) target = $region44
        $region43: #{tpu_custom_call.1} parent=31 // pred_region
          %s1491 = ssub.s32 128, 128
          %1492 = vsyncadd %s1483, %s1491
          %s1493 = smul.addr %s21, 128
          %s1494 = scalar_lea.hbm %s3, %s1493
          %s1496 = sshll.u32 %s1486, 4
          %s1497 = int_to_ptr.vmem [resolvable:$true] %s1496
          %1499 = dma.vmem_to_hbm [thread:$0]  %s1497, 128, %s1494, %s1483
        $region44: #{tpu_custom_call.1} parent=31 // pred_fallthru
          _
      $region32: #{tpu_custom_call.1} parent=5 // pred_fallthru
        _
      %p1500 = scmp.le.s32.totalorder 2, %s16
      // Predicated region
      $region45: #{tpu_custom_call.1} parent=5 // pred_check
        %p1501 = pneg %p1500
      $region46: #{tpu_custom_call.1} parent=5 // pred_check_branch
        %1503 = sbr.rel (%p1501) target = $region48
      $region47: #{tpu_custom_call.1} parent=5 // pred_region
        %s1504 = ssub.s32 %s16, 2
        // Predicated region
        $region49: #{tpu_custom_call.1} parent=47 // pred_check
          %p1505 = pneg %p113
        $region50: #{tpu_custom_call.1} parent=47 // pred_check_branch
          %1507 = sbr.rel (%p1505) target = $region52
        $region51: #{tpu_custom_call.1} parent=47 // pred_region
          %s1508 = sand.u32 %s98, 1
          %s1509 = scalar_lea.sflag [#allocation4], %s1508
          %s1510 = sand.u32 %s98, 1
          %s1511 = smul.addr %s1510, 8
          %s1512 = scalar_lea.vmem [#allocation7], %s1511
          %1513 = dma.done %s1509, 128
        $region52: #{tpu_custom_call.1} parent=47 // pred_fallthru
          _
      $region48: #{tpu_custom_call.1} parent=5 // pred_fallthru
        _
    $region6: #{tpu_custom_call.1} parent=1 // loop_footer
      %s20 = sadd.s32 1, %s16
    $region7: #{tpu_custom_call.1} parent=1 // loop_footer_branch
      %15 = sbr.rel target = $region3
    $region8: #{tpu_custom_call.1} parent=1 // loop_exit
      _
    %1514 = vsyncpa [#allocation3], 1
    %s1515 = scalar_lea.sflag [#allocation3], 1
    %1516 = vsyncpa %s1515, 1
    %1517 = vsyncpa [#allocation6], 1
    %1518 = vsyncpa [#allocation4], 1
    %s1519 = scalar_lea.sflag [#allocation4], 1
    %1520 = vsyncpa %s1519, 1

</llo_original>
